<compile_context>
chip_gen: v7x
topology: tpu7x:2x2x1
jax: 0.10.0
libtpu: 0.0.40
codegen_flags: <defaults>
</compile_context>

<pallas_src>
import jax
import jax.numpy as jnp
from jax.experimental import pallas as pl
from jax.experimental.pallas import tpu as pltpu

# ----------------------- synthetic config (small) ---------------------------
IMAGE_SIZE = 16
PATCH_SIZE = 8
CHANNELS = 3          # LanguageBindAudio feeds 3-channel spectrogram "images"
HIDDEN = 128
HEADS = 4
HEAD_DIM = HIDDEN // HEADS
INTERMEDIATE = 256
NUM_LAYERS = 2
SELECT_LAYER = -2     # args.mm_vision_select_layer (typical LLaVA/EAGLE value)
SELECT_FEATURE = "patch"
EPS = 1e-5

NUM_PATCHES = (IMAGE_SIZE // PATCH_SIZE) ** 2
SEQ_LEN = NUM_PATCHES + 1                 # +1 CLS token
PATCH_DIM = CHANNELS * PATCH_SIZE * PATCH_SIZE

# hidden_states[k] == output after k encoder layers (hidden_states[0] =
# embeddings after pre_layrnorm).  Only layers feeding hidden_states[SELECT_LAYER]
# are computed.
_LAYERS_TO_RUN = (SELECT_LAYER if SELECT_LAYER >= 0
                  else NUM_LAYERS + 1 + SELECT_LAYER)
assert _LAYERS_TO_RUN >= 1, "select_layer must consume at least one encoder layer"

# Exact divide instead of the EUP approx reciprocal when validating bit-parity
# against a reference softmax.
_APPROX_RECIPROCAL = True

# Consolidated small-parameter slab: 8 rows per layer, padded to width W.
_SMALL_ROWS = 8  # ln1w ln1b bqkv bo ln2w ln2b b1 b2


# ----------------------------- Pallas kernel --------------------------------
def _ln(x, w, b):
    mean = jnp.mean(x, axis=-1, keepdims=True)
    var = jnp.mean((x - mean) ** 2, axis=-1, keepdims=True)
    return (x - mean) * jax.lax.rsqrt(var + EPS) * w + b


def _fused_tower_kernel(patches_ref, wpatch_ref, const_ref,
                        wqkv_ref, wo_ref, w1_ref, w2_ref, small_ref,
                        o_ref, x_ref):
    """Grid = (batch_tiles, layers).  x_ref: resident (Bt, S, D) token slab."""
    l = pl.program_id(1)
    n_l = pl.num_programs(1)

    Bt, S, K = patches_ref.shape
    D, H, HD, I = HIDDEN, HEADS, HEAD_DIM, INTERMEDIATE
    M = Bt * S
    bf16, f32 = jnp.bfloat16, jnp.float32

    # ---- layer step 0: patch-embed + CLS/pos embedding + pre_layrnorm -------
    # Row 0 of the patch slab is a zero "CLS patch"; the class embedding is
    # folded into const row 0, so one matmul + one add builds the token slab.
    @pl.when(l == 0)
    def _():
        cst = const_ref[...]                       # (S+2, D) f32
        emb = cst[0:S]                             # pos emb (CLS folded into row 0)
        plnw, plnb = cst[S], cst[S + 1]
        x0 = jnp.dot(patches_ref[...].reshape(M, K), wpatch_ref[...],
                     preferred_element_type=f32)   # (M, D), folded batch rows
        x0 = x0.reshape(Bt, S, D) + emb[None, :, :]
        x0 = _ln(x0.reshape(M, D), plnw, plnb)
        x_ref[...] = x0.reshape(Bt, S, D)

    # ---- encoder layer l (weights for this layer streamed into VMEM) --------
    sm = small_ref[0]                              # (8, W) consolidated params
    ln1w, ln1b = sm[0, :D], sm[1, :D]
    bqkv = sm[2, :3 * D]
    bo = sm[3, :D]
    ln2w, ln2b = sm[4, :D], sm[5, :D]
    b1, b2 = sm[6, :I], sm[7, :D]

    x = x_ref[...].reshape(M, D)                   # f32 token slab (folded batch)

    # self-attention (pre-LN); softmax scale pre-folded into Q weights/bias.
    h = _ln(x, ln1w, ln1b)
    qkv = jnp.dot(h.astype(bf16), wqkv_ref[0],
                  preferred_element_type=f32) + bqkv          # (M, 3D)
    qkv = qkv.astype(bf16).reshape(Bt, S, 3 * D)   # single bf16 cast, reused

    ctx_parts = []
    for bt in range(Bt):                           # static unroll (Bt kept small);
        qkv_b = qkv[bt]                            # attention never mixes samples
        q = qkv_b[:, 0 * D:1 * D].reshape(S, H, HD)
        k = qkv_b[:, 1 * D:2 * D].reshape(S, H, HD)
        v = qkv_b[:, 2 * D:3 * D].reshape(S, H, HD)
        s = jnp.einsum('qhd,khd->hqk', q, k,
                       preferred_element_type=f32)            # (H, S, S)
        s = s - jnp.max(s, axis=-1, keepdims=True)
        p = jnp.exp(s)
        # deferred softmax normalization: scale the (S,H,HD) context instead of
        # re-touching the (H,S,S) probability tensor.
        rowsum = jnp.sum(p, axis=-1).T                        # (S, H)
        if _APPROX_RECIPROCAL:
            r = pl.reciprocal(rowsum, approx=True)
        else:
            r = 1.0 / rowsum
        c = jnp.einsum('hqk,khd->qhd', p.astype(bf16), v,
                       preferred_element_type=f32)            # (S, H, HD)
        ctx_parts.append((c * r[:, :, None]).reshape(S, D))
    ctx = ctx_parts[0] if Bt == 1 else jnp.concatenate(ctx_parts, axis=0)

    attn = jnp.dot(ctx.astype(bf16), wo_ref[0],
                   preferred_element_type=f32) + bo
    x = x + attn

    # MLP (pre-LN, quick_gelu as in CLIP)
    h2 = _ln(x, ln2w, ln2b)
    mid = jnp.dot(h2.astype(bf16), w1_ref[0],
                  preferred_element_type=f32) + b1
    mid = mid * jax.nn.sigmoid(1.702 * mid)
    mlp = jnp.dot(mid.astype(bf16), w2_ref[0],
                  preferred_element_type=f32) + b2
    x = x + mlp
    x_ref[...] = x.reshape(Bt, S, D)

    # ---- last layer step: emit hidden_states[select_layer] minus CLS row ----
    @pl.when(l == n_l - 1)
    def _():
        o_ref[...] = x.reshape(Bt, S, D)[:, 1:, :].astype(o_ref.dtype)


# ------------------------------ wrapper --------------------------------------
def _pick_batch_tile(batch, seq, target_rows=256, max_unroll=16):
    """Largest divisor Bt of `batch` with Bt*seq <= target_rows (256-aligned M
    rows for the v6e/v7x MXU; 128 suffices on v5e), capped by max_unroll for
    the per-sample attention loop, preferring >= 2 grid steps along the
    parallel batch axis so both v7x TensorCores get work."""
    divisors = [d for d in range(1, batch + 1) if batch % d == 0]
    fitting = [d for d in divisors if d * seq <= target_rows and d <= max_unroll]
    if not fitting:
        fitting = [1]
    bt = max(fitting)
    if batch // bt < 2:
        two_step = [d for d in fitting if batch // d >= 2]
        if two_step:
            bt = max(two_step)
    return bt


def _nbytes(shape, dtype):
    n = 1
    for s in shape:
        n *= int(s)
    return n * jnp.dtype(dtype).itemsize


def language_bind_audio_tower_forward(images, params):
    """images: (B, C, H, W) NCHW -> (B, num_patches, hidden)."""
    images_f = images.astype(jnp.float32)
    B, C, Him, Wim = images_f.shape
    p = PATCH_SIZE
    gh, gw = Him // p, Wim // p
    P = gh * gw
    S, D, I, K = P + 1, HIDDEN, INTERMEDIATE, C * p * p
    L = _LAYERS_TO_RUN
    W = max(3 * D, I)                      # width of the small-param slab

    # --- glue: stride==kernel conv patches + zero CLS patch, bf16 on host ----
    patches = images_f.reshape(B, C, gh, p, gw, p).transpose(0, 2, 4, 1, 3, 5)
    patches = patches.reshape(B, P, K)
    patches = jnp.concatenate(
        [jnp.zeros((B, 1, K), jnp.float32), patches], axis=1)  # (B, S, K)
    patches = patches.astype(jnp.bfloat16)

    # --- glue: fuse / pre-scale / stack parameters (once per call) -----------
    w_patch = params["patch_w"].reshape(D, K).T.astype(jnp.bfloat16)   # (K, D)
    emb = params["pos_emb"].at[0].add(params["cls_emb"])               # (S, D)
    const = jnp.concatenate(
        [emb, params["pre_ln_w"], params["pre_ln_b"]], axis=0)         # (S+2, D)

    def _pad_row(v):
        v = v.reshape(-1)
        return jnp.pad(v, (0, W - v.shape[0]))

    scale = HEAD_DIM ** -0.5
    wqkv_l, wo_l, w1_l, w2_l, small_l = [], [], [], [], []
    for lp in params["layers"][:L]:
        (ln1w, ln1b, wq, bq, wk, bk, wv, bv, wo, bo,
         ln2w, ln2b, w1, b1, w2, b2) = lp
        wqkv_l.append(jnp.concatenate([wq * scale, wk, wv], axis=1)
                      .astype(jnp.bfloat16))                           # (D, 3D)
        wo_l.append(wo.astype(jnp.bfloat16))
        w1_l.append(w1.astype(jnp.bfloat16))
        w2_l.append(w2.astype(jnp.bfloat16))
        bqkv = jnp.concatenate([bq * scale, bk, bv], axis=1)           # (1, 3D)
        small_l.append(jnp.stack([_pad_row(ln1w), _pad_row(ln1b),
                                  _pad_row(bqkv), _pad_row(bo),
                                  _pad_row(ln2w), _pad_row(ln2b),
                                  _pad_row(b1), _pad_row(b2)]))        # (8, W)
    wqkv_all = jnp.stack(wqkv_l)           # (L, D, 3D) bf16, streamed per layer
    wo_all = jnp.stack(wo_l)               # (L, D, D)
    w1_all = jnp.stack(w1_l)               # (L, D, I)
    w2_all = jnp.stack(w2_l)               # (L, I, D)
    small_all = jnp.stack(small_l)         # (L, 8, W) f32

    # --- grid / specs ---------------------------------------------------------
    Bt = _pick_batch_tile(B, S)
    grid = (B // Bt, L)

    grid_spec = pltpu.PrefetchScalarGridSpec(
        num_scalar_prefetch=0,
        grid=grid,
        in_specs=[
            pl.BlockSpec((Bt, S, K), lambda b, l: (b, 0, 0)),      # patches
            pl.BlockSpec((K, D), lambda b, l: (0, 0)),             # patch weight
            pl.BlockSpec((S + 2, D), lambda b, l: (0, 0)),         # emb + pre-LN
            pl.BlockSpec((1, D, 3 * D), lambda b, l: (l, 0, 0)),   # wqkv (streamed)
            pl.BlockSpec((1, D, D), lambda b, l: (l, 0, 0)),       # wo
            pl.BlockSpec((1, D, I), lambda b, l: (l, 0, 0)),       # w1
            pl.BlockSpec((1, I, D), lambda b, l: (l, 0, 0)),       # w2
            pl.BlockSpec((1, _SMALL_ROWS, W), lambda b, l: (l, 0, 0)),  # biases/LN
        ],
        out_specs=pl.BlockSpec((Bt, P, D), lambda b, l: (b, 0, 0)),
        scratch_shapes=[pltpu.VMEM((Bt, S, D), jnp.float32)],      # token slab
    )

    # VMEM ceiling sized to the actual resident set (2x for pipeline buffers)
    resident = (
        2 * _nbytes((Bt, S, K), jnp.bfloat16)
        + 2 * _nbytes((K, D), jnp.bfloat16)
        + 2 * _nbytes((S + 2, D), jnp.float32)
        + 2 * (_nbytes((D, 3 * D), jnp.bfloat16) + _nbytes((D, D), jnp.bfloat16)
               + _nbytes((D, I), jnp.bfloat16) + _nbytes((I, D), jnp.bfloat16)
               + _nbytes((_SMALL_ROWS, W), jnp.float32))
        + 2 * _nbytes((Bt, P, D), jnp.float32)
        + _nbytes((Bt, S, D), jnp.float32))
    vmem_limit = min(100 * 1024 * 1024, resident + 16 * 1024 * 1024)

    layer_w_bytes = (_nbytes((D, 3 * D), jnp.bfloat16) + _nbytes((D, D), jnp.bfloat16)
                     + _nbytes((D, I), jnp.bfloat16) + _nbytes((I, D), jnp.bfloat16)
                     + _nbytes((_SMALL_ROWS, W), jnp.float32))
    cost = pl.CostEstimate(
        flops=int(B * (2 * S * K * D
                       + L * (2 * S * D * 3 * D            # qkv proj
                              + 4 * HEADS * S * S * HEAD_DIM  # scores + ctx
                              + 2 * S * D * D              # out proj
                              + 4 * S * D * I))),          # mlp
        transcendentals=int(B * L * (HEADS * S * S + S * I)),
        bytes_accessed=int(_nbytes((B, S, K), jnp.bfloat16)
                           + _nbytes((K, D), jnp.bfloat16)
                           + _nbytes((S + 2, D), jnp.float32)
                           + (B // Bt) * L * layer_w_bytes
                           + _nbytes((B, P, D), jnp.float32)))

    feats = pl.pallas_call(
        _fused_tower_kernel,
        out_shape=jax.ShapeDtypeStruct((B, P, D), jnp.float32),
        grid_spec=grid_spec,
        compiler_params=pltpu.CompilerParams(
            dimension_semantics=("parallel", "arbitrary"),
            vmem_limit_bytes=int(vmem_limit)),
        cost_estimate=cost,
    )(patches, w_patch, const, wqkv_all, wo_all, w1_all, w2_all, small_all)

    # feature_select: 'patch' (CLS already dropped inside the kernel);
    # 'cls_patch' would require out_shape (B, S, D) and storing all rows.
    return feats.astype(images.dtype)


# ----------------------------- parameter init --------------------------------
def init_params(key):
    def nrm(k, shape, scale=0.02):
        return (scale * jax.random.normal(k, shape)).astype(jnp.float32)

    keys = jax.random.split(key, 4 + NUM_LAYERS)
    params = {}
    # conv patch-embed weight, PyTorch layout (D, C, p, p), no bias (CLIP)
    params["patch_w"] = nrm(keys[0], (HIDDEN, CHANNELS, PATCH_SIZE, PATCH_SIZE))
    params["cls_emb"] = nrm(keys[1], (HIDDEN,))
    params["pos_emb"] = nrm(keys[2], (SEQ_LEN, HIDDEN))
    params["pre_ln_w"] = jnp.ones((1, HIDDEN), jnp.float32)
    params["pre_ln_b"] = jnp.zeros((1, HIDDEN), jnp.float32)

    layers = []
    for li in range(NUM_LAYERS):
        lk = jax.random.split(keys[4 + li], 6)
        layers.append([
            jnp.ones((1, HIDDEN), jnp.float32),                 # ln1 w
            jnp.zeros((1, HIDDEN), jnp.float32),                # ln1 b
            nrm(lk[0], (HIDDEN, HIDDEN)),                       # wq
            jnp.zeros((1, HIDDEN), jnp.float32),                # bq
            nrm(lk[1], (HIDDEN, HIDDEN)),                       # wk
            jnp.zeros((1, HIDDEN), jnp.float32),                # bk
            nrm(lk[2], (HIDDEN, HIDDEN)),                       # wv
            jnp.zeros((1, HIDDEN), jnp.float32),                # bv
            nrm(lk[3], (HIDDEN, HIDDEN)),                       # wo
            jnp.zeros((1, HIDDEN), jnp.float32),                # bo
            jnp.ones((1, HIDDEN), jnp.float32),                 # ln2 w
            jnp.zeros((1, HIDDEN), jnp.float32),                # ln2 b
            nrm(lk[4], (HIDDEN, INTERMEDIATE)),                 # w1
            jnp.zeros((1, INTERMEDIATE), jnp.float32),          # b1
            nrm(lk[5], (INTERMEDIATE, HIDDEN)),                 # w2
            jnp.zeros((1, HIDDEN), jnp.float32),                # b2
        ])
    params["layers"] = layers
    return params

# TODO(synk): from_pretrained checkpoint loading / LanguageBindAudioProcessor
# (tokenizer + audio preprocessing) and the list-of-images Python path have no
# Pallas equivalent; weights here are synthetic.


# --------------------------------- main ---------------------------------------
if __name__ == "__main__":
    key = jax.random.PRNGKey(0)
    images = jax.random.normal(key, (2, CHANNELS, IMAGE_SIZE, IMAGE_SIZE),
                               dtype=jnp.float32)
    params = init_params(jax.random.PRNGKey(42))

    forward = jax.jit(language_bind_audio_tower_forward)
    feats = jax.block_until_ready(forward(images, params))
    assert feats.shape == (2, NUM_PATCHES, HIDDEN), feats.shape
    assert bool(jnp.all(jnp.isfinite(feats))), "non-finite output"
    print("KERNEL_OK")
</pallas_src>

<mosaic_0001>
module attributes {stable_mosaic.version = 11 : i64} {
  func.func @_fused_tower_kernel(%arg0: i32, %arg1: i32, %arg2: memref<1x5x192xbf16, #tpu.memory_space<vmem>>, %arg3: memref<192x128xbf16, #tpu.memory_space<vmem>>, %arg4: memref<7x128xf32, #tpu.memory_space<vmem>>, %arg5: memref<1x128x384xbf16, #tpu.memory_space<vmem>>, %arg6: memref<1x128x128xbf16, #tpu.memory_space<vmem>>, %arg7: memref<1x128x256xbf16, #tpu.memory_space<vmem>>, %arg8: memref<1x256x128xbf16, #tpu.memory_space<vmem>>, %arg9: memref<1x8x384xf32, #tpu.memory_space<vmem>>, %arg10: memref<1x4x128xf32, #tpu.memory_space<vmem>>, %arg11: memref<1x5x128xf32, #tpu.memory_space<vmem>>) attributes {dimension_semantics = [#tpu.dimension_semantics<parallel>, #tpu.dimension_semantics<arbitrary>], iteration_bounds = array<i64: 2, 1>, scalar_prefetch = 0 : i64, scratch_operands = 1 : i64, tpu.core_type = #tpu.core_type<tc>, window_params = [{transform_indices = @transform_0, window_bounds = array<i64: 1, 5, 192>}, {pipeline_mode = #tpu.pipeline_mode<synchronous>, transform_indices = @transform_1, window_bounds = array<i64: 192, 128>}, {pipeline_mode = #tpu.pipeline_mode<synchronous>, transform_indices = @transform_2, window_bounds = array<i64: 7, 128>}, {transform_indices = @transform_3, window_bounds = array<i64: 1, 128, 384>}, {transform_indices = @transform_4, window_bounds = array<i64: 1, 128, 128>}, {transform_indices = @transform_5, window_bounds = array<i64: 1, 128, 256>}, {transform_indices = @transform_6, window_bounds = array<i64: 1, 256, 128>}, {transform_indices = @transform_7, window_bounds = array<i64: 1, 8, 384>}, {transform_indices = @transform_8, window_bounds = array<i64: 1, 4, 128>}]} {
    %c0_i32 = arith.constant 0 : i32
    %0 = arith.cmpi eq, %arg1, %c0_i32 : i32
    %1 = arith.extui %0 : i1 to i32
    %c0_i32_0 = arith.constant 0 : i32
    %2 = arith.cmpi ne, %1, %c0_i32_0 : i32
    scf.if %2 {
      %c0_42 = arith.constant 0 : index
      %c0_43 = arith.constant 0 : index
      %139 = vector.load %arg4[%c0_42, %c0_43] : memref<7x128xf32, #tpu.memory_space<vmem>>, vector<7x128xf32>
      %140 = vector.extract_strided_slice %139 {offsets = [0, 0], sizes = [5, 128], strides = [1, 1]} : vector<7x128xf32> to vector<5x128xf32>
      %141 = vector.extract_strided_slice %139 {offsets = [5, 0], sizes = [1, 128], strides = [1, 1]} : vector<7x128xf32> to vector<1x128xf32>
      %142 = vector.shape_cast %141 : vector<1x128xf32> to vector<128xf32>
      %143 = vector.extract_strided_slice %139 {offsets = [6, 0], sizes = [1, 128], strides = [1, 1]} : vector<7x128xf32> to vector<1x128xf32>
      %144 = vector.shape_cast %143 : vector<1x128xf32> to vector<128xf32>
      %c0_44 = arith.constant 0 : index
      %c0_45 = arith.constant 0 : index
      %c0_46 = arith.constant 0 : index
      %145 = vector.load %arg2[%c0_44, %c0_45, %c0_46] : memref<1x5x192xbf16, #tpu.memory_space<vmem>>, vector<1x5x192xbf16>
      %146 = vector.shape_cast %145 : vector<1x5x192xbf16> to vector<5x192xbf16>
      %c0_47 = arith.constant 0 : index
      %c0_48 = arith.constant 0 : index
      %147 = vector.load %arg3[%c0_47, %c0_48] : memref<192x128xbf16, #tpu.memory_space<vmem>>, vector<192x128xbf16>
      %cst_49 = arith.constant dense<0.000000e+00> : vector<5x128xf32>
      %148 = tpu.matmul %146, %147, %cst_49 {dimension_numbers = #tpu.dot_dimension_numbers<[1], [0], [0], [1], [0, 0, 1, 1], [], []>} : vector<5x192xbf16>, vector<192x128xbf16>, vector<5x128xf32> -> vector<5x128xf32>
      %149 = vector.shape_cast %148 : vector<5x128xf32> to vector<1x5x128xf32>
      %150 = vector.shape_cast %140 : vector<5x128xf32> to vector<1x5x128xf32>
      %151 = arith.addf %149, %150 : vector<1x5x128xf32>
      %152 = vector.shape_cast %151 : vector<1x5x128xf32> to vector<5x128xf32>
      %cst_50 = arith.constant dense<0.000000e+00> : vector<5xf32>
      %153 = vector.multi_reduction <add>, %152, %cst_50 [1] : vector<5x128xf32> to vector<5xf32>
      %154 = vector.shape_cast %153 : vector<5xf32> to vector<5x1xf32>
      %cst_51 = arith.constant 1.280000e+02 : f32
      %155 = vector.broadcast %cst_51 : f32 to vector<5x1xf32>
      %156 = arith.divf %154, %155 : vector<5x1xf32>
      %157 = vector.broadcast %156 : vector<5x1xf32> to vector<5x128xf32>
      %158 = arith.subf %152, %157 : vector<5x128xf32>
      %159 = arith.mulf %158, %158 : vector<5x128xf32>
      %cst_52 = arith.constant dense<0.000000e+00> : vector<5xf32>
      %160 = vector.multi_reduction <add>, %159, %cst_52 [1] : vector<5x128xf32> to vector<5xf32>
      %161 = vector.shape_cast %160 : vector<5xf32> to vector<5x1xf32>
      %cst_53 = arith.constant 1.280000e+02 : f32
      %162 = vector.broadcast %cst_53 : f32 to vector<5x1xf32>
      %163 = arith.divf %161, %162 : vector<5x1xf32>
      %164 = vector.broadcast %156 : vector<5x1xf32> to vector<5x128xf32>
      %165 = arith.subf %152, %164 : vector<5x128xf32>
      %cst_54 = arith.constant 9.99999974E-6 : f32
      %166 = vector.broadcast %cst_54 : f32 to vector<5x1xf32>
      %167 = arith.addf %163, %166 : vector<5x1xf32>
      %168 = math.rsqrt %167 : vector<5x1xf32>
      %169 = vector.broadcast %168 : vector<5x1xf32> to vector<5x128xf32>
      %170 = arith.mulf %165, %169 : vector<5x128xf32>
      %171 = vector.shape_cast %142 : vector<128xf32> to vector<1x128xf32>
      %172 = vector.broadcast %171 : vector<1x128xf32> to vector<5x128xf32>
      %173 = arith.mulf %170, %172 : vector<5x128xf32>
      %174 = vector.shape_cast %144 : vector<128xf32> to vector<1x128xf32>
      %175 = vector.broadcast %174 : vector<1x128xf32> to vector<5x128xf32>
      %176 = arith.addf %173, %175 : vector<5x128xf32>
      %177 = vector.shape_cast %176 : vector<5x128xf32> to vector<1x5x128xf32>
      %c0_55 = arith.constant 0 : index
      %c0_56 = arith.constant 0 : index
      %c0_57 = arith.constant 0 : index
      %178 = vector.load %arg11[%c0_55, %c0_56, %c0_57] : memref<1x5x128xf32, #tpu.memory_space<vmem>>, vector<1x5x128xf32>
      tpu.vector_store %arg11[%c0_55, %c0_56, %c0_57], %177 {strides = array<i32>} : memref<1x5x128xf32, #tpu.memory_space<vmem>>, vector<1x5x128xf32>,
    } else {
    }
    %c0 = arith.constant 0 : index
    %c0_1 = arith.constant 0 : index
    %c0_2 = arith.constant 0 : index
    %3 = vector.load %arg9[%c0, %c0_1, %c0_2] : memref<1x8x384xf32, #tpu.memory_space<vmem>>, vector<1x8x384xf32>
    %4 = vector.shape_cast %3 : vector<1x8x384xf32> to vector<8x384xf32>
    %5 = vector.extract_strided_slice %4 {offsets = [0, 0], sizes = [1, 128], strides = [1, 1]} : vector<8x384xf32> to vector<1x128xf32>
    %6 = vector.shape_cast %5 : vector<1x128xf32> to vector<128xf32>
    %7 = vector.extract_strided_slice %4 {offsets = [1, 0], sizes = [1, 128], strides = [1, 1]} : vector<8x384xf32> to vector<1x128xf32>
    %8 = vector.shape_cast %7 : vector<1x128xf32> to vector<128xf32>
    %9 = vector.extract_strided_slice %4 {offsets = [2, 0], sizes = [1, 384], strides = [1, 1]} : vector<8x384xf32> to vector<1x384xf32>
    %10 = vector.shape_cast %9 : vector<1x384xf32> to vector<384xf32>
    %11 = vector.extract_strided_slice %4 {offsets = [3, 0], sizes = [1, 128], strides = [1, 1]} : vector<8x384xf32> to vector<1x128xf32>
    %12 = vector.shape_cast %11 : vector<1x128xf32> to vector<128xf32>
    %13 = vector.extract_strided_slice %4 {offsets = [4, 0], sizes = [1, 128], strides = [1, 1]} : vector<8x384xf32> to vector<1x128xf32>
    %14 = vector.shape_cast %13 : vector<1x128xf32> to vector<128xf32>
    %15 = vector.extract_strided_slice %4 {offsets = [5, 0], sizes = [1, 128], strides = [1, 1]} : vector<8x384xf32> to vector<1x128xf32>
    %16 = vector.shape_cast %15 : vector<1x128xf32> to vector<128xf32>
    %17 = vector.extract_strided_slice %4 {offsets = [6, 0], sizes = [1, 256], strides = [1, 1]} : vector<8x384xf32> to vector<1x256xf32>
    %18 = vector.shape_cast %17 : vector<1x256xf32> to vector<256xf32>
    %19 = vector.extract_strided_slice %4 {offsets = [7, 0], sizes = [1, 128], strides = [1, 1]} : vector<8x384xf32> to vector<1x128xf32>
    %20 = vector.shape_cast %19 : vector<1x128xf32> to vector<128xf32>
    %c0_3 = arith.constant 0 : index
    %c0_4 = arith.constant 0 : index
    %c0_5 = arith.constant 0 : index
    %21 = vector.load %arg11[%c0_3, %c0_4, %c0_5] : memref<1x5x128xf32, #tpu.memory_space<vmem>>, vector<1x5x128xf32>
    %22 = vector.shape_cast %21 : vector<1x5x128xf32> to vector<5x128xf32>
    %cst = arith.constant dense<0.000000e+00> : vector<5xf32>
    %23 = vector.multi_reduction <add>, %22, %cst [1] : vector<5x128xf32> to vector<5xf32>
    %24 = vector.shape_cast %23 : vector<5xf32> to vector<5x1xf32>
    %cst_6 = arith.constant 1.280000e+02 : f32
    %25 = vector.broadcast %cst_6 : f32 to vector<5x1xf32>
    %26 = arith.divf %24, %25 : vector<5x1xf32>
    %27 = vector.broadcast %26 : vector<5x1xf32> to vector<5x128xf32>
    %28 = arith.subf %22, %27 : vector<5x128xf32>
    %29 = arith.mulf %28, %28 : vector<5x128xf32>
    %cst_7 = arith.constant dense<0.000000e+00> : vector<5xf32>
    %30 = vector.multi_reduction <add>, %29, %cst_7 [1] : vector<5x128xf32> to vector<5xf32>
    %31 = vector.shape_cast %30 : vector<5xf32> to vector<5x1xf32>
    %cst_8 = arith.constant 1.280000e+02 : f32
    %32 = vector.broadcast %cst_8 : f32 to vector<5x1xf32>
    %33 = arith.divf %31, %32 : vector<5x1xf32>
    %34 = vector.broadcast %26 : vector<5x1xf32> to vector<5x128xf32>
    %35 = arith.subf %22, %34 : vector<5x128xf32>
    %cst_9 = arith.constant 9.99999974E-6 : f32
    %36 = vector.broadcast %cst_9 : f32 to vector<5x1xf32>
    %37 = arith.addf %33, %36 : vector<5x1xf32>
    %38 = math.rsqrt %37 : vector<5x1xf32>
    %39 = vector.broadcast %38 : vector<5x1xf32> to vector<5x128xf32>
    %40 = arith.mulf %35, %39 : vector<5x128xf32>
    %41 = vector.shape_cast %6 : vector<128xf32> to vector<1x128xf32>
    %42 = vector.broadcast %41 : vector<1x128xf32> to vector<5x128xf32>
    %43 = arith.mulf %40, %42 : vector<5x128xf32>
    %44 = vector.shape_cast %8 : vector<128xf32> to vector<1x128xf32>
    %45 = vector.broadcast %44 : vector<1x128xf32> to vector<5x128xf32>
    %46 = arith.addf %43, %45 : vector<5x128xf32>
    %47 = arith.truncf %46 : vector<5x128xf32> to vector<5x128xbf16>
    %c0_10 = arith.constant 0 : index
    %c0_11 = arith.constant 0 : index
    %c0_12 = arith.constant 0 : index
    %48 = vector.load %arg5[%c0_10, %c0_11, %c0_12] : memref<1x128x384xbf16, #tpu.memory_space<vmem>>, vector<1x128x384xbf16>
    %49 = vector.shape_cast %48 : vector<1x128x384xbf16> to vector<128x384xbf16>
    %cst_13 = arith.constant dense<0.000000e+00> : vector<5x384xf32>
    %50 = tpu.matmul %47, %49, %cst_13 {dimension_numbers = #tpu.dot_dimension_numbers<[1], [0], [0], [1], [0, 0, 1, 1], [], []>} : vector<5x128xbf16>, vector<128x384xbf16>, vector<5x384xf32> -> vector<5x384xf32>
    %51 = vector.shape_cast %10 : vector<384xf32> to vector<1x384xf32>
    %52 = vector.broadcast %51 : vector<1x384xf32> to vector<5x384xf32>
    %53 = arith.addf %50, %52 : vector<5x384xf32>
    %54 = arith.truncf %53 : vector<5x384xf32> to vector<5x384xbf16>
    %55 = vector.shape_cast %54 : vector<5x384xbf16> to vector<1x5x384xbf16>
    %56 = vector.shape_cast %55 : vector<1x5x384xbf16> to vector<5x384xbf16>
    %57 = vector.extract_strided_slice %56 {offsets = [0, 0], sizes = [5, 128], strides = [1, 1]} : vector<5x384xbf16> to vector<5x128xbf16>
    %58 = vector.shape_cast %57 : vector<5x128xbf16> to vector<5x4x32xbf16>
    %59 = vector.extract_strided_slice %56 {offsets = [0, 128], sizes = [5, 128], strides = [1, 1]} : vector<5x384xbf16> to vector<5x128xbf16>
    %60 = vector.shape_cast %59 : vector<5x128xbf16> to vector<5x4x32xbf16>
    %61 = vector.extract_strided_slice %56 {offsets = [0, 256], sizes = [5, 128], strides = [1, 1]} : vector<5x384xbf16> to vector<5x128xbf16>
    %62 = vector.shape_cast %61 : vector<5x128xbf16> to vector<5x4x32xbf16>
    "tpu.trace_start"() <{level = 10 : i32, message = "qhd,khd->hqk"}> : () -> ()
    %cst_14 = arith.constant dense<0.000000e+00> : vector<4x5x5xf32>
    %63 = tpu.matmul %58, %60, %cst_14 {dimension_numbers = #tpu.dot_dimension_numbers<[2], [2], [0], [0], [0, 1, 0, 0, 1, 0], [1], [1]>} : vector<5x4x32xbf16>, vector<5x4x32xbf16>, vector<4x5x5xf32> -> vector<4x5x5xf32>
    "tpu.trace_stop"() : () -> ()
    %cst_15 = arith.constant dense<0xFF800000> : vector<4x5xf32>
    %64 = vector.multi_reduction <maximumf>, %63, %cst_15 [2] : vector<4x5x5xf32> to vector<4x5xf32>
    %65 = vector.shape_cast %64 : vector<4x5xf32> to vector<4x5x1xf32>
    %66 = vector.broadcast %65 : vector<4x5x1xf32> to vector<4x5x5xf32>
    %67 = arith.subf %63, %66 : vector<4x5x5xf32>
    %68 = math.exp %67 : vector<4x5x5xf32>
    %cst_16 = arith.constant dense<0.000000e+00> : vector<4x5xf32>
    %69 = vector.multi_reduction <add>, %68, %cst_16 [2] : vector<4x5x5xf32> to vector<4x5xf32>
    %70 = tpu.transpose %69, [1, 0] : vector<4x5xf32> -> vector<5x4xf32>
    %71 = tpu.reciprocal %70 {approx = true} : vector<5x4xf32> -> vector<5x4xf32>
    %72 = arith.truncf %68 : vector<4x5x5xf32> to vector<4x5x5xbf16>
    "tpu.trace_start"() <{level = 10 : i32, message = "hqk,khd->qhd"}> : () -> ()
    %cst_17 = arith.constant dense<0.000000e+00> : vector<4x32x5xf32>
    %73 = tpu.matmul %62, %72, %cst_17 {dimension_numbers = #tpu.dot_dimension_numbers<[0], [2], [2], [1], [0, 1, 0, 2, 1, 1], [1], [0]>} : vector<5x4x32xbf16>, vector<4x5x5xbf16>, vector<4x32x5xf32> -> vector<4x32x5xf32>
    %74 = tpu.transpose %73, [2, 0, 1] : vector<4x32x5xf32> -> vector<5x4x32xf32>
    "tpu.trace_stop"() : () -> ()
    %75 = vector.shape_cast %71 : vector<5x4xf32> to vector<5x4x1xf32>
    %76 = vector.broadcast %75 : vector<5x4x1xf32> to vector<5x4x32xf32>
    %77 = arith.mulf %74, %76 : vector<5x4x32xf32>
    %78 = vector.shape_cast %77 : vector<5x4x32xf32> to vector<5x128xf32>
    %79 = arith.truncf %78 : vector<5x128xf32> to vector<5x128xbf16>
    %c0_18 = arith.constant 0 : index
    %c0_19 = arith.constant 0 : index
    %c0_20 = arith.constant 0 : index
    %80 = vector.load %arg6[%c0_18, %c0_19, %c0_20] : memref<1x128x128xbf16, #tpu.memory_space<vmem>>, vector<1x128x128xbf16>
    %81 = vector.shape_cast %80 : vector<1x128x128xbf16> to vector<128x128xbf16>
    %cst_21 = arith.constant dense<0.000000e+00> : vector<5x128xf32>
    %82 = tpu.matmul %79, %81, %cst_21 {dimension_numbers = #tpu.dot_dimension_numbers<[1], [0], [0], [1], [0, 0, 1, 1], [], []>} : vector<5x128xbf16>, vector<128x128xbf16>, vector<5x128xf32> -> vector<5x128xf32>
    %83 = vector.shape_cast %12 : vector<128xf32> to vector<1x128xf32>
    %84 = vector.broadcast %83 : vector<1x128xf32> to vector<5x128xf32>
    %85 = arith.addf %82, %84 : vector<5x128xf32>
    %86 = arith.addf %22, %85 : vector<5x128xf32>
    %cst_22 = arith.constant dense<0.000000e+00> : vector<5xf32>
    %87 = vector.multi_reduction <add>, %86, %cst_22 [1] : vector<5x128xf32> to vector<5xf32>
    %88 = vector.shape_cast %87 : vector<5xf32> to vector<5x1xf32>
    %cst_23 = arith.constant 1.280000e+02 : f32
    %89 = vector.broadcast %cst_23 : f32 to vector<5x1xf32>
    %90 = arith.divf %88, %89 : vector<5x1xf32>
    %91 = vector.broadcast %90 : vector<5x1xf32> to vector<5x128xf32>
    %92 = arith.subf %86, %91 : vector<5x128xf32>
    %93 = arith.mulf %92, %92 : vector<5x128xf32>
    %cst_24 = arith.constant dense<0.000000e+00> : vector<5xf32>
    %94 = vector.multi_reduction <add>, %93, %cst_24 [1] : vector<5x128xf32> to vector<5xf32>
    %95 = vector.shape_cast %94 : vector<5xf32> to vector<5x1xf32>
    %cst_25 = arith.constant 1.280000e+02 : f32
    %96 = vector.broadcast %cst_25 : f32 to vector<5x1xf32>
    %97 = arith.divf %95, %96 : vector<5x1xf32>
    %98 = vector.broadcast %90 : vector<5x1xf32> to vector<5x128xf32>
    %99 = arith.subf %86, %98 : vector<5x128xf32>
    %cst_26 = arith.constant 9.99999974E-6 : f32
    %100 = vector.broadcast %cst_26 : f32 to vector<5x1xf32>
    %101 = arith.addf %97, %100 : vector<5x1xf32>
    %102 = math.rsqrt %101 : vector<5x1xf32>
    %103 = vector.broadcast %102 : vector<5x1xf32> to vector<5x128xf32>
    %104 = arith.mulf %99, %103 : vector<5x128xf32>
    %105 = vector.shape_cast %14 : vector<128xf32> to vector<1x128xf32>
    %106 = vector.broadcast %105 : vector<1x128xf32> to vector<5x128xf32>
    %107 = arith.mulf %104, %106 : vector<5x128xf32>
    %108 = vector.shape_cast %16 : vector<128xf32> to vector<1x128xf32>
    %109 = vector.broadcast %108 : vector<1x128xf32> to vector<5x128xf32>
    %110 = arith.addf %107, %109 : vector<5x128xf32>
    %111 = arith.truncf %110 : vector<5x128xf32> to vector<5x128xbf16>
    %c0_27 = arith.constant 0 : index
    %c0_28 = arith.constant 0 : index
    %c0_29 = arith.constant 0 : index
    %112 = vector.load %arg7[%c0_27, %c0_28, %c0_29] : memref<1x128x256xbf16, #tpu.memory_space<vmem>>, vector<1x128x256xbf16>
    %113 = vector.shape_cast %112 : vector<1x128x256xbf16> to vector<128x256xbf16>
    %cst_30 = arith.constant dense<0.000000e+00> : vector<5x256xf32>
    %114 = tpu.matmul %111, %113, %cst_30 {dimension_numbers = #tpu.dot_dimension_numbers<[1], [0], [0], [1], [0, 0, 1, 1], [], []>} : vector<5x128xbf16>, vector<128x256xbf16>, vector<5x256xf32> -> vector<5x256xf32>
    %115 = vector.shape_cast %18 : vector<256xf32> to vector<1x256xf32>
    %116 = vector.broadcast %115 : vector<1x256xf32> to vector<5x256xf32>
    %117 = arith.addf %114, %116 : vector<5x256xf32>
    %cst_31 = arith.constant 1.702000e+00 : f32
    %118 = vector.broadcast %cst_31 : f32 to vector<5x256xf32>
    %119 = arith.mulf %118, %117 : vector<5x256xf32>
    %120 = arith.negf %119 : vector<5x256xf32>
    %121 = math.exp %120 : vector<5x256xf32>
    %cst_32 = arith.constant 1.000000e+00 : f32
    %122 = vector.broadcast %cst_32 : f32 to vector<5x256xf32>
    %123 = arith.addf %122, %121 : vector<5x256xf32>
    %124 = arith.divf %122, %123 : vector<5x256xf32>
    %125 = arith.mulf %117, %124 : vector<5x256xf32>
    %126 = arith.truncf %125 : vector<5x256xf32> to vector<5x256xbf16>
    %c0_33 = arith.constant 0 : index
    %c0_34 = arith.constant 0 : index
    %c0_35 = arith.constant 0 : index
    %127 = vector.load %arg8[%c0_33, %c0_34, %c0_35] : memref<1x256x128xbf16, #tpu.memory_space<vmem>>, vector<1x256x128xbf16>
    %128 = vector.shape_cast %127 : vector<1x256x128xbf16> to vector<256x128xbf16>
    %cst_36 = arith.constant dense<0.000000e+00> : vector<5x128xf32>
    %129 = tpu.matmul %126, %128, %cst_36 {dimension_numbers = #tpu.dot_dimension_numbers<[1], [0], [0], [1], [0, 0, 1, 1], [], []>} : vector<5x256xbf16>, vector<256x128xbf16>, vector<5x128xf32> -> vector<5x128xf32>
    %130 = vector.shape_cast %20 : vector<128xf32> to vector<1x128xf32>
    %131 = vector.broadcast %130 : vector<1x128xf32> to vector<5x128xf32>
    %132 = arith.addf %129, %131 : vector<5x128xf32>
    %133 = arith.addf %86, %132 : vector<5x128xf32>
    %134 = vector.shape_cast %133 : vector<5x128xf32> to vector<1x5x128xf32>
    %c0_37 = arith.constant 0 : index
    %c0_38 = arith.constant 0 : index
    %c0_39 = arith.constant 0 : index
    %135 = vector.load %arg11[%c0_37, %c0_38, %c0_39] : memref<1x5x128xf32, #tpu.memory_space<vmem>>, vector<1x5x128xf32>
    tpu.vector_store %arg11[%c0_37, %c0_38, %c0_39], %134 {strides = array<i32>} : memref<1x5x128xf32, #tpu.memory_space<vmem>>, vector<1x5x128xf32>,
    %c0_i32_40 = arith.constant 0 : i32
    %136 = arith.cmpi eq, %arg1, %c0_i32_40 : i32
    %137 = arith.extui %136 : i1 to i32
    %c0_i32_41 = arith.constant 0 : i32
    %138 = arith.cmpi ne, %137, %c0_i32_41 : i32
    scf.if %138 {
      %139 = vector.shape_cast %133 : vector<5x128xf32> to vector<1x5x128xf32>
      %140 = vector.extract_strided_slice %139 {offsets = [0, 1, 0], sizes = [1, 4, 128], strides = [1, 1, 1]} : vector<1x5x128xf32> to vector<1x4x128xf32>
      %c0_42 = arith.constant 0 : index
      %c0_43 = arith.constant 0 : index
      %c0_44 = arith.constant 0 : index
      %141 = vector.load %arg10[%c0_42, %c0_43, %c0_44] : memref<1x4x128xf32, #tpu.memory_space<vmem>>, vector<1x4x128xf32>
      tpu.vector_store %arg10[%c0_42, %c0_43, %c0_44], %140 {strides = array<i32>} : memref<1x4x128xf32, #tpu.memory_space<vmem>>, vector<1x4x128xf32>,
    } else {
    }
    return
  }
  func.func @transform_0(%arg0: i32, %arg1: i32) -> (i32, i32, i32) {
    %c0_i32 = arith.constant 0 : i32
    %c0_i32_0 = arith.constant 0 : i32
    %c0_i32_1 = arith.constant 0 : i32
    return %arg0, %c0_i32, %c0_i32_0 : i32, i32, i32
  }
  func.func @transform_1(%arg0: i32, %arg1: i32) -> (i32, i32) {
    %c0_i32 = arith.constant 0 : i32
    %c0_i32_0 = arith.constant 0 : i32
    %c0_i32_1 = arith.constant 0 : i32
    return %c0_i32, %c0_i32_0 : i32, i32
  }
  func.func @transform_2(%arg0: i32, %arg1: i32) -> (i32, i32) {
    %c0_i32 = arith.constant 0 : i32
    %c0_i32_0 = arith.constant 0 : i32
    %c0_i32_1 = arith.constant 0 : i32
    return %c0_i32, %c0_i32_0 : i32, i32
  }
  func.func @transform_3(%arg0: i32, %arg1: i32) -> (i32, i32, i32) {
    %c0_i32 = arith.constant 0 : i32
    %c0_i32_0 = arith.constant 0 : i32
    %c0_i32_1 = arith.constant 0 : i32
    return %arg1, %c0_i32, %c0_i32_0 : i32, i32, i32
  }
  func.func @transform_4(%arg0: i32, %arg1: i32) -> (i32, i32, i32) {
    %c0_i32 = arith.constant 0 : i32
    %c0_i32_0 = arith.constant 0 : i32
    %c0_i32_1 = arith.constant 0 : i32
    return %arg1, %c0_i32, %c0_i32_0 : i32, i32, i32
  }
  func.func @transform_5(%arg0: i32, %arg1: i32) -> (i32, i32, i32) {
    %c0_i32 = arith.constant 0 : i32
    %c0_i32_0 = arith.constant 0 : i32
    %c0_i32_1 = arith.constant 0 : i32
    return %arg1, %c0_i32, %c0_i32_0 : i32, i32, i32
  }
  func.func @transform_6(%arg0: i32, %arg1: i32) -> (i32, i32, i32) {
    %c0_i32 = arith.constant 0 : i32
    %c0_i32_0 = arith.constant 0 : i32
    %c0_i32_1 = arith.constant 0 : i32
    return %arg1, %c0_i32, %c0_i32_0 : i32, i32, i32
  }
  func.func @transform_7(%arg0: i32, %arg1: i32) -> (i32, i32, i32) {
    %c0_i32 = arith.constant 0 : i32
    %c0_i32_0 = arith.constant 0 : i32
    %c0_i32_1 = arith.constant 0 : i32
    return %arg1, %c0_i32, %c0_i32_0 : i32, i32, i32
  }
  func.func @transform_8(%arg0: i32, %arg1: i32) -> (i32, i32, i32) {
    %c0_i32 = arith.constant 0 : i32
    %c0_i32_0 = arith.constant 0 : i32
    %c0_i32_1 = arith.constant 0 : i32
    return %arg0, %c0_i32, %c0_i32_0 : i32, i32, i32
  }
}

</mosaic_0001>

<llo_original>
// kernel: language_bind_audio_tower_forward.1
$region0: #{language_bind_audio_tower_forward.1}
  #allocation0 [shape = 'u32[]', space=smem, size = 0x4, offset = 0x4, fixed_abs, tag = 'smem constant byte address 0x4 - core index']
  #allocation1 [shape = 'u32[144,128]{1,0:T(1,128)}', space=vmem, size = 0x12000, scoped, tag = 'internal scratch']
  #allocation2 [shape = 'f32[1,5,128]{2,1,0:T(8,128)}', space=vmem, size = 0x1000, scoped, tag = 'scratch operand']
  %s0 = inlined_call_operand.vmem [shape: bf16[2,5,192], index: 0, kind: input, shape index: {}]
  %s1 = inlined_call_operand.vmem [shape: bf16[192,128], index: 1, kind: input, shape index: {}]
  %s2 = inlined_call_operand.vmem [shape: f32[7,128], index: 2, kind: input, shape index: {}]
  %s3 = inlined_call_operand.vmem [shape: bf16[1,128,384], index: 3, kind: input, shape index: {}]
  %s4 = inlined_call_operand.vmem [shape: bf16[1,128,128], index: 4, kind: input, shape index: {}]
  %s5 = inlined_call_operand.vmem [shape: bf16[1,128,256], index: 5, kind: input, shape index: {}]
  %s6 = inlined_call_operand.vmem [shape: bf16[1,256,128], index: 6, kind: input, shape index: {}]
  %s7 = inlined_call_operand.vmem [shape: f32[1,8,384], index: 7, kind: input, shape index: {}]
  %s8 = inlined_call_operand.hbm [shape: f32[2,4,128], index: 8, kind: output, shape index: {}]
  %s9 = sld [smem:[#allocation0]]
  $region73: #{language_bind_audio_tower_forward.1} parent=0
    _
  %s11 = ssub.s32 1, %s9
  %s12 = scalar_select 0, %s11, %s9
  $region1: #{language_bind_audio_tower_forward.1} parent=0
    #allocation3 [shape = 'u8[4096]{0}', space=vmem, size = 0x1000, scoped, tag = 'output window, operand 0']
    #allocation4 [shape = 's32[2]{0}', space=sflag, size = 0x8, scoped, tag = 'scoped memory for language_bind_audio_tower_forward.1']
    %13 = vsyncpa [#allocation4], 0
    %s14 = scalar_lea.sflag [#allocation4], 1
    %15 = vsyncpa %s14, 0
    loop: start=0, step=1, limit=4
    $region2: #{language_bind_audio_tower_forward.1} parent=1 // loop_pre_header
      _
    $region3: #{language_bind_audio_tower_forward.1} parent=1 // loop_header
      %s17 = sphi 0, %s21
      %p18 = scmp.ge.s32.totalorder %s17, 4
      %s24 = sphi 0, %s36
      %s25 = sphi 0, %s32
      %s26 = sphi 0, %s24
      %s27 = sphi 0, %s25
      %s28 = sphi 0, %s26
      %s29 = sphi 0, %s27
      %s39 = sphi 0, %s41
      %s42 = sphi 0, %s39
      %s43 = sphi 0, %s42
      %s59 = sphi 0, %s43
      %s63 = sphi 0, %s63
      %s65 = sphi 0, %s63
      %s66 = sphi 0, %s65
      %s80 = sphi 0, %s66
      %s84 = sphi 0, %s84
      %s86 = sphi 0, %s84
      %s87 = sphi 0, %s86
      %s101 = sphi 0, %s87
      %s107 = sphi 0, %s109
      %s110 = sphi 0, %s107
      %s111 = sphi 0, %s110
      %s127 = sphi 0, %s111
      %s133 = sphi 0, %s135
      %s136 = sphi 0, %s133
      %s137 = sphi 0, %s136
      %s153 = sphi 0, %s137
      %s159 = sphi 0, %s161
      %s162 = sphi 0, %s159
      %s163 = sphi 0, %s162
      %s179 = sphi 0, %s163
      %s185 = sphi 0, %s187
      %s188 = sphi 0, %s185
      %s189 = sphi 0, %s188
      %s205 = sphi 0, %s189
      %s211 = sphi 0, %s213
      %s214 = sphi 0, %s211
      %s215 = sphi 0, %s214
      %s231 = sphi 0, %s215
      %s237 = sphi 0, %s239
      %s240 = sphi 0, %s237
      %s241 = sphi 0, %s240
      %s257 = sphi 0, %s241
    $region4: #{language_bind_audio_tower_forward.1} parent=1 // loop_header_branch
      %20 = sbr.rel (%p18) target = $region8
    $region5: #{language_bind_audio_tower_forward.1} parent=1 // loop_body
      %s22 = ssub.s32 %s17, 1
      %s23 = ssub.s32 %s17, 2
      %s30 = sadd.s32 1, %s25
      %p31 = scmp.ge.s32.totalorder %s30, 1
      %s32 = scalar_select %p31, 0, %s30
      %s33 = sadd.s32 1, %s24
      %s34 = scalar_select %p31, %s33, %s24
      %p35 = scmp.ge.s32.totalorder %s34, 2
      %s36 = scalar_select %p35, 0, %s34
      %s37 = ssub.s32 %s24, %s36
      %p38 = scmp.eq.s32.totalorder %s37, 0
      %s40 = sadd.s32 %s39, 1
      %s41 = scalar_select %p38, %s39, %s40
      %p44 = pneg %p38
      %p45 = scmp.eq.s32.totalorder %s17, 1
      %p46 = por %p44, %p45
      %p47 = scmp.ne.s32.totalorder %s39, %s42
      %p48 = scmp.eq.s32.totalorder %s17, 0
      %p49 = por %p47, %p48
      %p50 = scmp.ne.s32.totalorder %s39, %s42
      %p51 = scmp.eq.s32.totalorder %s22, 1
      %p52 = por %p50, %p51
      %p53 = scmp.ne.s32.totalorder %s42, %s43
      %p54 = scmp.eq.s32.totalorder %s22, 0
      %p55 = por %p53, %p54
      %p56 = scmp.ne.s32.totalorder %s42, %s43
      %p57 = scmp.eq.s32.totalorder %s23, 1
      %p58 = por %p56, %p57
      %p60 = scmp.ne.s32.totalorder %s43, %s59
      %p61 = scmp.eq.s32.totalorder %s23, 0
      %p62 = por %p60, %p61
      %s64 = sadd.s32 %s63, 1
      %p67 = scmp.eq.s32.totalorder %s17, 1
      %p68 = scmp.ne.s32.totalorder %s63, %s65
      %p69 = scmp.eq.s32.totalorder %s17, 0
      %p70 = por %p68, %p69
      %p71 = scmp.ne.s32.totalorder %s63, %s65
      %p72 = scmp.eq.s32.totalorder %s22, 1
      %p73 = por %p71, %p72
      %p74 = scmp.ne.s32.totalorder %s65, %s66
      %p75 = scmp.eq.s32.totalorder %s22, 0
      %p76 = por %p74, %p75
      %p77 = scmp.ne.s32.totalorder %s65, %s66
      %p78 = scmp.eq.s32.totalorder %s23, 1
      %p79 = por %p77, %p78
      %p81 = scmp.ne.s32.totalorder %s66, %s80
      %p82 = scmp.eq.s32.totalorder %s23, 0
      %p83 = por %p81, %p82
      %s85 = sadd.s32 %s84, 1
      %p88 = scmp.eq.s32.totalorder %s17, 1
      %p89 = scmp.ne.s32.totalorder %s84, %s86
      %p90 = scmp.eq.s32.totalorder %s17, 0
      %p91 = por %p89, %p90
      %p92 = scmp.ne.s32.totalorder %s84, %s86
      %p93 = scmp.eq.s32.totalorder %s22, 1
      %p94 = por %p92, %p93
      %p95 = scmp.ne.s32.totalorder %s86, %s87
      %p96 = scmp.eq.s32.totalorder %s22, 0
      %p97 = por %p95, %p96
      %p98 = scmp.ne.s32.totalorder %s86, %s87
      %p99 = scmp.eq.s32.totalorder %s23, 1
      %p100 = por %p98, %p99
      %p102 = scmp.ne.s32.totalorder %s87, %s101
      %p103 = scmp.eq.s32.totalorder %s23, 0
      %p104 = por %p102, %p103
      %s105 = ssub.s32 %s25, %s32
      %p106 = scmp.eq.s32.totalorder %s105, 0
      %s108 = sadd.s32 %s107, 1
      %s109 = scalar_select %p106, %s107, %s108
      %p112 = pneg %p106
      %p113 = scmp.eq.s32.totalorder %s17, 1
      %p114 = por %p112, %p113
      %p115 = scmp.ne.s32.totalorder %s107, %s110
      %p116 = scmp.eq.s32.totalorder %s17, 0
      %p117 = por %p115, %p116
      %p118 = scmp.ne.s32.totalorder %s107, %s110
      %p119 = scmp.eq.s32.totalorder %s22, 1
      %p120 = por %p118, %p119
      %p121 = scmp.ne.s32.totalorder %s110, %s111
      %p122 = scmp.eq.s32.totalorder %s22, 0
      %p123 = por %p121, %p122
      %p124 = scmp.ne.s32.totalorder %s110, %s111
      %p125 = scmp.eq.s32.totalorder %s23, 1
      %p126 = por %p124, %p125
      %p128 = scmp.ne.s32.totalorder %s111, %s127
      %p129 = scmp.eq.s32.totalorder %s23, 0
      %p130 = por %p128, %p129
      %s131 = ssub.s32 %s25, %s32
      %p132 = scmp.eq.s32.totalorder %s131, 0
      %s134 = sadd.s32 %s133, 1
      %s135 = scalar_select %p132, %s133, %s134
      %p138 = pneg %p132
      %p139 = scmp.eq.s32.totalorder %s17, 1
      %p140 = por %p138, %p139
      %p141 = scmp.ne.s32.totalorder %s133, %s136
      %p142 = scmp.eq.s32.totalorder %s17, 0
      %p143 = por %p141, %p142
      %p144 = scmp.ne.s32.totalorder %s133, %s136
      %p145 = scmp.eq.s32.totalorder %s22, 1
      %p146 = por %p144, %p145
      %p147 = scmp.ne.s32.totalorder %s136, %s137
      %p148 = scmp.eq.s32.totalorder %s22, 0
      %p149 = por %p147, %p148
      %p150 = scmp.ne.s32.totalorder %s136, %s137
      %p151 = scmp.eq.s32.totalorder %s23, 1
      %p152 = por %p150, %p151
      %p154 = scmp.ne.s32.totalorder %s137, %s153
      %p155 = scmp.eq.s32.totalorder %s23, 0
      %p156 = por %p154, %p155
      %s157 = ssub.s32 %s25, %s32
      %p158 = scmp.eq.s32.totalorder %s157, 0
      %s160 = sadd.s32 %s159, 1
      %s161 = scalar_select %p158, %s159, %s160
      %p164 = pneg %p158
      %p165 = scmp.eq.s32.totalorder %s17, 1
      %p166 = por %p164, %p165
      %p167 = scmp.ne.s32.totalorder %s159, %s162
      %p168 = scmp.eq.s32.totalorder %s17, 0
      %p169 = por %p167, %p168
      %p170 = scmp.ne.s32.totalorder %s159, %s162
      %p171 = scmp.eq.s32.totalorder %s22, 1
      %p172 = por %p170, %p171
      %p173 = scmp.ne.s32.totalorder %s162, %s163
      %p174 = scmp.eq.s32.totalorder %s22, 0
      %p175 = por %p173, %p174
      %p176 = scmp.ne.s32.totalorder %s162, %s163
      %p177 = scmp.eq.s32.totalorder %s23, 1
      %p178 = por %p176, %p177
      %p180 = scmp.ne.s32.totalorder %s163, %s179
      %p181 = scmp.eq.s32.totalorder %s23, 0
      %p182 = por %p180, %p181
      %s183 = ssub.s32 %s25, %s32
      %p184 = scmp.eq.s32.totalorder %s183, 0
      %s186 = sadd.s32 %s185, 1
      %s187 = scalar_select %p184, %s185, %s186
      %p190 = pneg %p184
      %p191 = scmp.eq.s32.totalorder %s17, 1
      %p192 = por %p190, %p191
      %p193 = scmp.ne.s32.totalorder %s185, %s188
      %p194 = scmp.eq.s32.totalorder %s17, 0
      %p195 = por %p193, %p194
      %p196 = scmp.ne.s32.totalorder %s185, %s188
      %p197 = scmp.eq.s32.totalorder %s22, 1
      %p198 = por %p196, %p197
      %p199 = scmp.ne.s32.totalorder %s188, %s189
      %p200 = scmp.eq.s32.totalorder %s22, 0
      %p201 = por %p199, %p200
      %p202 = scmp.ne.s32.totalorder %s188, %s189
      %p203 = scmp.eq.s32.totalorder %s23, 1
      %p204 = por %p202, %p203
      %p206 = scmp.ne.s32.totalorder %s189, %s205
      %p207 = scmp.eq.s32.totalorder %s23, 0
      %p208 = por %p206, %p207
      %s209 = ssub.s32 %s25, %s32
      %p210 = scmp.eq.s32.totalorder %s209, 0
      %s212 = sadd.s32 %s211, 1
      %s213 = scalar_select %p210, %s211, %s212
      %p216 = pneg %p210
      %p217 = scmp.eq.s32.totalorder %s17, 1
      %p218 = por %p216, %p217
      %p219 = scmp.ne.s32.totalorder %s211, %s214
      %p220 = scmp.eq.s32.totalorder %s17, 0
      %p221 = por %p219, %p220
      %p222 = scmp.ne.s32.totalorder %s211, %s214
      %p223 = scmp.eq.s32.totalorder %s22, 1
      %p224 = por %p222, %p223
      %p225 = scmp.ne.s32.totalorder %s214, %s215
      %p226 = scmp.eq.s32.totalorder %s22, 0
      %p227 = por %p225, %p226
      %p228 = scmp.ne.s32.totalorder %s214, %s215
      %p229 = scmp.eq.s32.totalorder %s23, 1
      %p230 = por %p228, %p229
      %p232 = scmp.ne.s32.totalorder %s215, %s231
      %p233 = scmp.eq.s32.totalorder %s23, 0
      %p234 = por %p232, %p233
      %s235 = ssub.s32 %s24, %s36
      %p236 = scmp.eq.s32.totalorder %s235, 0
      %s238 = sadd.s32 %s237, 1
      %s239 = scalar_select %p236, %s237, %s238
      %p242 = pneg %p236
      %p243 = scmp.eq.s32.totalorder %s17, 1
      %p244 = por %p242, %p243
      %p245 = scmp.ne.s32.totalorder %s237, %s240
      %p246 = scmp.eq.s32.totalorder %s17, 0
      %p247 = por %p245, %p246
      %p248 = scmp.ne.s32.totalorder %s237, %s240
      %p249 = scmp.eq.s32.totalorder %s22, 1
      %p250 = por %p248, %p249
      %p251 = scmp.ne.s32.totalorder %s240, %s241
      %p252 = scmp.eq.s32.totalorder %s22, 0
      %p253 = por %p251, %p252
      %p254 = scmp.ne.s32.totalorder %s240, %s241
      %p255 = scmp.eq.s32.totalorder %s23, 1
      %p256 = por %p254, %p255
      %p258 = scmp.ne.s32.totalorder %s241, %s257
      %p259 = scmp.eq.s32.totalorder %s23, 0
      %p260 = por %p258, %p259
      %p261 = scmp.le.s32.totalorder 1, %s17
      %p262 = scmp.lt.s32.totalorder %s17, 3
      %p263 = pnand %p261, %p262
      %p264 = pneg %p263
      // Predicated region
      $region9: #{language_bind_audio_tower_forward.1} parent=5 // pred_check
        _
      $region10: #{language_bind_audio_tower_forward.1} parent=5 // pred_check_branch
        %266 = sbr.rel (%p263) target = $region12
      $region11: #{language_bind_audio_tower_forward.1} parent=5 // pred_region
        %s267 = ssub.s32 %s17, 1
        // Predicated region
        $region13: #{language_bind_audio_tower_forward.1} parent=11 // pred_check
          %p268 = pneg %p76
        $region14: #{language_bind_audio_tower_forward.1} parent=11 // pred_check_branch
          %270 = sbr.rel (%p268) target = $region16
        $region15: #{language_bind_audio_tower_forward.1} parent=11 // pred_region
          _
        $region16: #{language_bind_audio_tower_forward.1} parent=11 // pred_fallthru
          _
        // Predicated region
        $region17: #{language_bind_audio_tower_forward.1} parent=11 // pred_check
          %p271 = pneg %p97
        $region18: #{language_bind_audio_tower_forward.1} parent=11 // pred_check_branch
          %273 = sbr.rel (%p271) target = $region20
        $region19: #{language_bind_audio_tower_forward.1} parent=11 // pred_region
          _
        $region20: #{language_bind_audio_tower_forward.1} parent=11 // pred_fallthru
          _
        // Predicated region
        $region21: #{language_bind_audio_tower_forward.1} parent=11 // pred_check
          %p274 = pneg %p123
        $region22: #{language_bind_audio_tower_forward.1} parent=11 // pred_check_branch
          %276 = sbr.rel (%p274) target = $region24
        $region23: #{language_bind_audio_tower_forward.1} parent=11 // pred_region
          %p277 = scmp.lt.s32.totalorder %s27, 0
          %s278 = scalar_select %p277, %s27, 0
          %s279 = smul.addr %s278, 48
          %s280 = smul.addr %s279, 4
          %s281 = scalar_lea.vmem %s3, %s280
        $region24: #{language_bind_audio_tower_forward.1} parent=11 // pred_fallthru
          _
        // Predicated region
        $region25: #{language_bind_audio_tower_forward.1} parent=11 // pred_check
          %p282 = pneg %p149
        $region26: #{language_bind_audio_tower_forward.1} parent=11 // pred_check_branch
          %284 = sbr.rel (%p282) target = $region28
        $region27: #{language_bind_audio_tower_forward.1} parent=11 // pred_region
          %p285 = scmp.lt.s32.totalorder %s27, 0
          %s286 = scalar_select %p285, %s27, 0
          %s287 = smul.addr %s286, 16
          %s288 = smul.addr %s287, 4
          %s289 = scalar_lea.vmem %s4, %s288
        $region28: #{language_bind_audio_tower_forward.1} parent=11 // pred_fallthru
          _
        // Predicated region
        $region29: #{language_bind_audio_tower_forward.1} parent=11 // pred_check
          %p290 = pneg %p175
        $region30: #{language_bind_audio_tower_forward.1} parent=11 // pred_check_branch
          %292 = sbr.rel (%p290) target = $region32
        $region31: #{language_bind_audio_tower_forward.1} parent=11 // pred_region
          %p293 = scmp.lt.s32.totalorder %s27, 0
          %s294 = scalar_select %p293, %s27, 0
          %s295 = smul.addr %s294, 32
          %s296 = smul.addr %s295, 4
          %s297 = scalar_lea.vmem %s5, %s296
        $region32: #{language_bind_audio_tower_forward.1} parent=11 // pred_fallthru
          _
        // Predicated region
        $region33: #{language_bind_audio_tower_forward.1} parent=11 // pred_check
          %p298 = pneg %p201
        $region34: #{language_bind_audio_tower_forward.1} parent=11 // pred_check_branch
          %300 = sbr.rel (%p298) target = $region36
        $region35: #{language_bind_audio_tower_forward.1} parent=11 // pred_region
          %p301 = scmp.lt.s32.totalorder %s27, 0
          %s302 = scalar_select %p301, %s27, 0
          %s303 = smul.addr %s302, 32
          %s304 = smul.addr %s303, 4
          %s305 = scalar_lea.vmem %s6, %s304
        $region36: #{language_bind_audio_tower_forward.1} parent=11 // pred_fallthru
          _
        // Predicated region
        $region37: #{language_bind_audio_tower_forward.1} parent=11 // pred_check
          %p306 = pneg %p227
        $region38: #{language_bind_audio_tower_forward.1} parent=11 // pred_check_branch
          %308 = sbr.rel (%p306) target = $region40
        $region39: #{language_bind_audio_tower_forward.1} parent=11 // pred_region
          %p309 = scmp.lt.s32.totalorder %s27, 0
          %s310 = scalar_select %p309, %s27, 0
          %s311 = smul.addr %s310, 3
          %s312 = smul.addr %s311, 8
          %s313 = scalar_lea.vmem %s7, %s312
        $region40: #{language_bind_audio_tower_forward.1} parent=11 // pred_fallthru
          _
      $region12: #{language_bind_audio_tower_forward.1} parent=5 // pred_fallthru
        _
      %p314 = scmp.lt.s32.totalorder %s17, 2
      // Predicated region
      $region41: #{language_bind_audio_tower_forward.1} parent=5 // pred_check
        %p315 = pneg %p314
      $region42: #{language_bind_audio_tower_forward.1} parent=5 // pred_check_branch
        %317 = sbr.rel (%p315) target = $region44
      $region43: #{language_bind_audio_tower_forward.1} parent=5 // pred_region
        // Predicated region
        $region45: #{language_bind_audio_tower_forward.1} parent=43 // pred_check
          %p318 = pneg %p49
        $region46: #{language_bind_audio_tower_forward.1} parent=43 // pred_check_branch
          %320 = sbr.rel (%p318) target = $region48
        $region47: #{language_bind_audio_tower_forward.1} parent=43 // pred_region
          %p321 = scmp.lt.s32.totalorder %s24, 1
          %s322 = scalar_select %p321, %s24, 1
          %s323 = smul.addr %s322, 2
          %s324 = smul.addr %s323, 4
          %s325 = scalar_lea.vmem %s0, %s324
        $region48: #{language_bind_audio_tower_forward.1} parent=43 // pred_fallthru
          _
      $region44: #{language_bind_audio_tower_forward.1} parent=5 // pred_fallthru
        _
      %p326 = scmp.le.s32.totalorder 1, %s17
      %p327 = scmp.lt.s32.totalorder %s17, 3
      %p328 = pnand %p326, %p327
      %p329 = pneg %p328
      // Predicated region
      $region49: #{language_bind_audio_tower_forward.1} parent=5 // pred_check
        _
      $region50: #{language_bind_audio_tower_forward.1} parent=5 // pred_check_branch
        %331 = sbr.rel (%p328) target = $region52
      $region51: #{language_bind_audio_tower_forward.1} parent=5 // pred_region
        %s332 = ssub.s32 %s17, 1
        %p333 = scmp.lt.s32.totalorder %s26, 1
        %s334 = scalar_select %p333, %s26, 1
        %s335 = smul.addr %s334, 2
        %s336 = smul.addr %s335, 4
        %s337 = scalar_lea.vmem %s0, %s336
        %p338 = pneg %p55
        %p339 = pneg %p52
        %p340 = pneg %p76
        %p341 = pneg %p73
        %p342 = pneg %p97
        %p343 = pneg %p94
        %p344 = scmp.lt.s32.totalorder %s27, 0
        %s345 = scalar_select %p344, %s27, 0
        %s346 = smul.addr %s345, 48
        %s347 = smul.addr %s346, 4
        %s348 = scalar_lea.vmem %s3, %s347
        %p349 = pneg %p123
        %p350 = pneg %p120
        %p351 = scmp.lt.s32.totalorder %s27, 0
        %s352 = scalar_select %p351, %s27, 0
        %s353 = smul.addr %s352, 16
        %s354 = smul.addr %s353, 4
        %s355 = scalar_lea.vmem %s4, %s354
        %p356 = pneg %p149
        %p357 = pneg %p146
        %p358 = scmp.lt.s32.totalorder %s27, 0
        %s359 = scalar_select %p358, %s27, 0
        %s360 = smul.addr %s359, 32
        %s361 = smul.addr %s360, 4
        %s362 = scalar_lea.vmem %s5, %s361
        %p363 = pneg %p175
        %p364 = pneg %p172
        %p365 = scmp.lt.s32.totalorder %s27, 0
        %s366 = scalar_select %p365, %s27, 0
        %s367 = smul.addr %s366, 32
        %s368 = smul.addr %s367, 4
        %s369 = scalar_lea.vmem %s6, %s368
        %p370 = pneg %p201
        %p371 = pneg %p198
        %p372 = scmp.lt.s32.totalorder %s27, 0
        %s373 = scalar_select %p372, %s27, 0
        %s374 = smul.addr %s373, 3
        %s375 = smul.addr %s374, 8
        %s376 = scalar_lea.vmem %s7, %s375
        %p377 = pneg %p227
        %p378 = pneg %p224
        %p379 = pneg %p253
        %p380 = pneg %p250
        %s381 = sand.u32 %s240, 1
        %s382 = scalar_lea.sflag [#allocation4], %s381
        %s383 = sand.u32 %s240, 1
        %s384 = smul.addr %s383, 4
        %s385 = scalar_lea.vmem [#allocation3], %s384
        %p386 = scmp.lt.s32.totalorder %s26, 1
        %s387 = scalar_select %p386, %s26, 1
        %s388 = smul.addr %s387, 2
        %s389 = smul.addr %s388, 4
        %s390 = scalar_lea.vmem %s0, %s389
        %p391 = scmp.lt.s32.totalorder %s27, 0
        %s392 = scalar_select %p391, %s27, 0
        %s393 = smul.addr %s392, 48
        %s394 = smul.addr %s393, 4
        %s395 = scalar_lea.vmem %s3, %s394
        %p396 = scmp.lt.s32.totalorder %s27, 0
        %s397 = scalar_select %p396, %s27, 0
        %s398 = smul.addr %s397, 16
        %s399 = smul.addr %s398, 4
        %s400 = scalar_lea.vmem %s4, %s399
        %p401 = scmp.lt.s32.totalorder %s27, 0
        %s402 = scalar_select %p401, %s27, 0
        %s403 = smul.addr %s402, 32
        %s404 = smul.addr %s403, 4
        %s405 = scalar_lea.vmem %s5, %s404
        %p406 = scmp.lt.s32.totalorder %s27, 0
        %s407 = scalar_select %p406, %s27, 0
        %s408 = smul.addr %s407, 32
        %s409 = smul.addr %s408, 4
        %s410 = scalar_lea.vmem %s6, %s409
        %p411 = scmp.lt.s32.totalorder %s27, 0
        %s412 = scalar_select %p411, %s27, 0
        %s413 = smul.addr %s412, 3
        %s414 = smul.addr %s413, 8
        %s415 = scalar_lea.vmem %s7, %s414
        %p417 = scmp.eq.s32.totalorder %s27, 0
        // Predicated region
        $region53: #{language_bind_audio_tower_forward.1} parent=51 // pred_check
          %p418 = pneg %p417
        $region54: #{language_bind_audio_tower_forward.1} parent=51 // pred_check_branch
          %420 = sbr.rel (%p418) target = $region56
        $region55: #{language_bind_audio_tower_forward.1} parent=51 // pred_region
          %v421 = vld [vmem:[%s2] sm:$0x7f]
          %v422 = vld [vmem:[%s390] sm:$0x77]
          %v423 = vld [vmem:[%s1] sm:$0xf]
          %v424 = vld [vmem:[%s1 + $0x4] sm:$0xf]
          %v425 = vld [vmem:[%s1 + $0x8] sm:$0xf]
          %v426 = vld [vmem:[%s1 + $0xc] sm:$0xf]
          %v427 = vld [vmem:[%s1 + $0x10] sm:$0xf]
          %v428 = vld [vmem:[%s1 + $0x14] sm:$0xf]
          %v429 = vld [vmem:[%s1 + $0x18] sm:$0xf]
          %v430 = vld [vmem:[%s1 + $0x1c] sm:$0xf]
          %v431 = vld [vmem:[%s1 + $0x20] sm:$0xf]
          %v432 = vld [vmem:[%s1 + $0x24] sm:$0xf]
          %v433 = vld [vmem:[%s1 + $0x28] sm:$0xf]
          %v434 = vld [vmem:[%s1 + $0x2c] sm:$0xf]
          %v435 = vld [vmem:[%s1 + $0x30] sm:$0xf]
          %v436 = vld [vmem:[%s1 + $0x34] sm:$0xf]
          %v437 = vld [vmem:[%s1 + $0x38] sm:$0xf]
          %v438 = vld [vmem:[%s1 + $0x3c] sm:$0xf]
          %v439 = vld [vmem:[%s1 + $0x40] sm:$0xf]
          %v440 = vld [vmem:[%s1 + $0x44] sm:$0xf]
          %v441 = vld [vmem:[%s1 + $0x48] sm:$0xf]
          %v442 = vld [vmem:[%s1 + $0x4c] sm:$0xf]
          %v443 = vld [vmem:[%s1 + $0x50] sm:$0xf]
          %v444 = vld [vmem:[%s1 + $0x54] sm:$0xf]
          %v445 = vld [vmem:[%s1 + $0x58] sm:$0xf]
          %v446 = vld [vmem:[%s1 + $0x5c] sm:$0xf]
          %v448 = vunpack.c.l.b16 %v422
          %v449 = vunpack.c.h.b16 %v422
          %v450 = vpack.c.b16 %v448, %v448
          %v451 = vpack.c.b16 %v449, %v449
          %v477 = vunpack.c.l.b16 %v423
          %v478 = vunpack.c.l.b16 %v424
          %v479 = vunpack.c.l.b16 %v425
          %v480 = vunpack.c.l.b16 %v426
          %v481 = vunpack.c.l.b16 %v427
          %v482 = vunpack.c.l.b16 %v428
          %v483 = vunpack.c.l.b16 %v429
          %v484 = vunpack.c.l.b16 %v430
          %v485 = vunpack.c.l.b16 %v431
          %v486 = vunpack.c.l.b16 %v432
          %v487 = vunpack.c.l.b16 %v433
          %v488 = vunpack.c.l.b16 %v434
          %v489 = vunpack.c.l.b16 %v435
          %v490 = vunpack.c.l.b16 %v436
          %v491 = vunpack.c.l.b16 %v437
          %v492 = vunpack.c.l.b16 %v438
          %v493 = vunpack.c.l.b16 %v439
          %v494 = vunpack.c.l.b16 %v440
          %v495 = vunpack.c.l.b16 %v441
          %v496 = vunpack.c.l.b16 %v442
          %v497 = vunpack.c.l.b16 %v443
          %v498 = vunpack.c.l.b16 %v444
          %v499 = vunpack.c.l.b16 %v445
          %v500 = vunpack.c.l.b16 %v446
          %v501 = vpack.c.b16 %v478, %v477
          %v502 = vpack.c.b16 %v480, %v479
          %v503 = vpack.c.b16 %v482, %v481
          %v504 = vpack.c.b16 %v484, %v483
          %v505 = vpack.c.b16 %v486, %v485
          %v506 = vpack.c.b16 %v488, %v487
          %v507 = vpack.c.b16 %v490, %v489
          %v508 = vpack.c.b16 %v492, %v491
          %v509 = vpack.c.b16 %v494, %v493
          %v510 = vpack.c.b16 %v496, %v495
          %v511 = vpack.c.b16 %v498, %v497
          %v512 = vpack.c.b16 %v500, %v499
          %vm525 = vcmask 523264
          %v527 = vsel %vm525, %v451, 0
          %529 = vmatprep.subr.bf16.mxu0 0
          %530 = vmatpush1.bf16.msra.mxu0 %v501
          %531 = vmatprep.subr.bf16.mxu0 0
          %532 = vmatpush1.bf16.msra.mxu0 %v502
          %533 = vmatprep.subr.bf16.mxu0 0
          %534 = vmatpush1.bf16.msra.mxu0 %v503
          %535 = vmatprep.subr.bf16.mxu0 0
          %536 = vmatpush1.bf16.msra.mxu0 %v504
          %537 = vmatprep.subr.bf16.mxu0 0
          %538 = vmatpush1.bf16.msra.mxu0 %v505
          %539 = vmatprep.subr.bf16.mxu0 0
          %540 = vmatpush1.bf16.msra.mxu0 %v506
          %541 = vmatprep.subr.bf16.mxu0 0
          %542 = vmatpush1.bf16.msra.mxu0 %v507
          %543 = vmatprep.subr.bf16.mxu0 0
          %544 = vmatpush1.bf16.msra.mxu0 %v508
          %545 = vmatprep.subr.bf16.mxu0 0
          %546 = vmatpush1.bf16.msra.mxu0 %v509
          %547 = vmatprep.subr.bf16.mxu0 0
          %548 = vmatpush1.bf16.msra.mxu0 %v510
          %549 = vmatprep.subr.bf16.mxu0 0
          %550 = vmatpush1.bf16.msra.mxu0 %v511
          %551 = vmatprep.subr.bf16.mxu0 0
          %552 = vmatpush1.bf16.msra.mxu0 %v512
          %553 = vmatprep.subr.bf16.mxu0 0
          %554 = vmatpush1.bf16.msra.mxu0 0
          %555 = vmatprep.subr.bf16.mxu0 0
          %556 = vmatpush1.bf16.msra.mxu0 0
          %557 = vmatprep.subr.bf16.mxu0 0
          %558 = vmatpush1.bf16.msra.mxu0 0
          %559 = vmatprep.subr.bf16.mxu0 0
          %560 = vmatpush1.bf16.msra.mxu0 0
          %561 = vmatprep.mubr.bf16.mxu0 %v527
          %562 = vmatmul.mubr.bf16.gmra.mrb[0].mxu0 %v450
          %v563 = vpop.f32.mrb[0].mxu0
          %v564 = vadd.f32 0.0, %v563
          %v565 = vpop.f32.mrb[0].mxu0
          %v566 = vpop.f32.mrb[0].mxu0
          %v567 = vpop.f32.mrb[0].mxu0
          %568 = vdwg.mxu0
          %v569 = vadd.f32 %v564, %v421
          %vm570 = vcmask 1044480
          %v571 = vsel %vm570, %v569, 0.0
          %572 = vadd.xlane.f32.xlu0 %v571
          %v573 = vpop.xlane.xlu0 %572
          %v574 = vrcp.pop 128.0
          %v575 = vmul.f32 %v573, %v574
          %v576 = vsub.f32 %v569, %v575
          %v577 = vmul.f32 %v576, %v576
          %v578 = vsel %vm570, %v577, 0.0
          %579 = vadd.xlane.f32.xlu0 %v578
          %v580 = vpop.xlane.xlu0 %579
          %v581 = vmul.f32 %v580, %v574
          %v582 = vadd.f32 %v581, 1e-05
          %v583 = vrsqrt.pop %v582
          %v584 = vmul.f32 %v576, %v583
          %v585 = vlaneseq
          %v586 = vshrl.u32 %v585, 7
          %v587 = vsub.s32 5, %v586
          %v588 = vrot.slane %v421, %v587
          %v589 = vmul.f32 %v584, %v588
          %v590 = vlaneseq
          %v591 = vshrl.u32 %v590, 7
          %v592 = vsub.s32 6, %v591
          %v593 = vrot.slane %v421, %v592
          %v594 = vadd.f32 %v589, %v593
          %595 = vst [vmem:[#allocation2] sm:$0x1f] %v594
        $region56: #{language_bind_audio_tower_forward.1} parent=51 // pred_fallthru
          _
        %v596 = vld [vmem:[%s415] sm:$0xff]
        %v597 = vld [vmem:[%s415 + $0x8] sm:$0xff]
        %v598 = vld [vmem:[%s415 + $0x10] sm:$0xff]
        %v599 = vld [vmem:[#allocation2] sm:$0x1f]
        %vm600 = vcmask 1044480
        %v601 = vsel %vm600, %v599, 0.0
        %602 = vadd.xlane.f32.xlu0 %v601
        %v603 = vpop.xlane.xlu0 %602
        %v604 = vrcp.pop 128.0
        %v605 = vmul.f32 %v603, %v604
        %v606 = vsub.f32 %v599, %v605
        %v607 = vmul.f32 %v606, %v606
        %v608 = vsel %vm600, %v607, 0.0
        %609 = vadd.xlane.f32.xlu0 %v608
        %v610 = vpop.xlane.xlu0 %609
        %v611 = vmul.f32 %v610, %v604
        %v612 = vadd.f32 %v611, 1e-05
        %v613 = vrsqrt.pop %v612
        %v614 = vmul.f32 %v606, %v613
        %v615 = vlaneseq
        %v616 = vshrl.u32 %v615, 7
        %v617 = vsub.s32 0, %v616
        %v618 = vrot.slane %v596, %v617
        %v619 = vmul.f32 %v614, %v618
        %v620 = vlaneseq
        %v621 = vshrl.u32 %v620, 7
        %v622 = vsub.s32 1, %v621
        %v623 = vrot.slane %v596, %v622
        %v624 = vadd.f32 %v619, %v623
        %v625 = vpack.c.bf16 %v624, %v624
        %v626 = vld [vmem:[%s395] sm:$0xff]
        %v627 = vld [vmem:[%s395 + $0x8] sm:$0xf]
        %v628 = vld [vmem:[%s395 + $0xc] sm:$0xff]
        %v629 = vld [vmem:[%s395 + $0x14] sm:$0xf]
        %v630 = vld [vmem:[%s395 + $0x18] sm:$0xff]
        %v631 = vld [vmem:[%s395 + $0x20] sm:$0xf]
        %v632 = vld [vmem:[%s395 + $0x24] sm:$0xff]
        %v633 = vld [vmem:[%s395 + $0x2c] sm:$0xf]
        %v634 = vld [vmem:[%s395 + $0x30] sm:$0xff]
        %v635 = vld [vmem:[%s395 + $0x38] sm:$0xf]
        %v636 = vld [vmem:[%s395 + $0x3c] sm:$0xff]
        %v637 = vld [vmem:[%s395 + $0x44] sm:$0xf]
        %v638 = vld [vmem:[%s395 + $0x48] sm:$0xff]
        %v639 = vld [vmem:[%s395 + $0x50] sm:$0xf]
        %v640 = vld [vmem:[%s395 + $0x54] sm:$0xff]
        %v641 = vld [vmem:[%s395 + $0x5c] sm:$0xf]
        %v642 = vld [vmem:[%s395 + $0x60] sm:$0xff]
        %v643 = vld [vmem:[%s395 + $0x68] sm:$0xf]
        %v644 = vld [vmem:[%s395 + $0x6c] sm:$0xff]
        %v645 = vld [vmem:[%s395 + $0x74] sm:$0xf]
        %v646 = vld [vmem:[%s395 + $0x78] sm:$0xff]
        %v647 = vld [vmem:[%s395 + $0x80] sm:$0xf]
        %v648 = vld [vmem:[%s395 + $0x84] sm:$0xff]
        %v649 = vld [vmem:[%s395 + $0x8c] sm:$0xf]
        %v650 = vld [vmem:[%s395 + $0x90] sm:$0xff]
        %v651 = vld [vmem:[%s395 + $0x98] sm:$0xf]
        %v652 = vld [vmem:[%s395 + $0x9c] sm:$0xff]
        %v653 = vld [vmem:[%s395 + $0xa4] sm:$0xf]
        %v654 = vld [vmem:[%s395 + $0xa8] sm:$0xff]
        %v655 = vld [vmem:[%s395 + $0xb0] sm:$0xf]
        %v656 = vld [vmem:[%s395 + $0xb4] sm:$0xff]
        %v657 = vld [vmem:[%s395 + $0xbc] sm:$0xf]
        %v658 = vlaneseq
        %v659 = vshrl.u32 %v658, 7
        %v660 = vsub.s32 2, %v659
        %v661 = vrot.slane %v596, %v660
        %v662 = vlaneseq
        %v663 = vshrl.u32 %v662, 7
        %v664 = vsub.s32 2, %v663
        %v665 = vrot.slane %v597, %v664
        %v666 = vlaneseq
        %v667 = vshrl.u32 %v666, 7
        %v668 = vsub.s32 2, %v667
        %v669 = vrot.slane %v598, %v668
        %v702 = vunpack.c.l.b16 %v626
        %v703 = vunpack.c.h.b16 %v626
        %v704 = vunpack.c.l.b16 %v627
        %v705 = vunpack.c.l.b16 %v628
        %v706 = vunpack.c.h.b16 %v628
        %v707 = vunpack.c.l.b16 %v629
        %v708 = vunpack.c.l.b16 %v630
        %v709 = vunpack.c.h.b16 %v630
        %v710 = vunpack.c.l.b16 %v631
        %v711 = vunpack.c.l.b16 %v632
        %v712 = vunpack.c.h.b16 %v632
        %v713 = vunpack.c.l.b16 %v633
        %v714 = vunpack.c.l.b16 %v634
        %v715 = vunpack.c.h.b16 %v634
        %v716 = vunpack.c.l.b16 %v635
        %v717 = vunpack.c.l.b16 %v636
        %v718 = vunpack.c.h.b16 %v636
        %v719 = vunpack.c.l.b16 %v637
        %v720 = vunpack.c.l.b16 %v638
        %v721 = vunpack.c.h.b16 %v638
        %v722 = vunpack.c.l.b16 %v639
        %v723 = vunpack.c.l.b16 %v640
        %v724 = vunpack.c.h.b16 %v640
        %v725 = vunpack.c.l.b16 %v641
        %v726 = vunpack.c.l.b16 %v642
        %v727 = vunpack.c.h.b16 %v642
        %v728 = vunpack.c.l.b16 %v643
        %v729 = vunpack.c.l.b16 %v644
        %v730 = vunpack.c.h.b16 %v644
        %v731 = vunpack.c.l.b16 %v645
        %v732 = vunpack.c.l.b16 %v646
        %v733 = vunpack.c.h.b16 %v646
        %v734 = vunpack.c.l.b16 %v647
        %v735 = vunpack.c.l.b16 %v648
        %v736 = vunpack.c.h.b16 %v648
        %v737 = vunpack.c.l.b16 %v649
        %v738 = vunpack.c.l.b16 %v650
        %v739 = vunpack.c.h.b16 %v650
        %v740 = vunpack.c.l.b16 %v651
        %v741 = vunpack.c.l.b16 %v652
        %v742 = vunpack.c.h.b16 %v652
        %v743 = vunpack.c.l.b16 %v653
        %v744 = vunpack.c.l.b16 %v654
        %v745 = vunpack.c.h.b16 %v654
        %v746 = vunpack.c.l.b16 %v655
        %v747 = vunpack.c.l.b16 %v656
        %v748 = vunpack.c.h.b16 %v656
        %v749 = vunpack.c.l.b16 %v657
        %v750 = vpack.c.b16 %v705, %v702
        %v751 = vpack.c.b16 %v706, %v703
        %v752 = vpack.c.b16 %v707, %v704
        %v753 = vpack.c.b16 %v711, %v708
        %v754 = vpack.c.b16 %v712, %v709
        %v755 = vpack.c.b16 %v713, %v710
        %v756 = vpack.c.b16 %v717, %v714
        %v757 = vpack.c.b16 %v718, %v715
        %v758 = vpack.c.b16 %v719, %v716
        %v759 = vpack.c.b16 %v723, %v720
        %v760 = vpack.c.b16 %v724, %v721
        %v761 = vpack.c.b16 %v725, %v722
        %v762 = vpack.c.b16 %v729, %v726
        %v763 = vpack.c.b16 %v730, %v727
        %v764 = vpack.c.b16 %v731, %v728
        %v765 = vpack.c.b16 %v735, %v732
        %v766 = vpack.c.b16 %v736, %v733
        %v767 = vpack.c.b16 %v737, %v734
        %v768 = vpack.c.b16 %v741, %v738
        %v769 = vpack.c.b16 %v742, %v739
        %v770 = vpack.c.b16 %v743, %v740
        %v771 = vpack.c.b16 %v747, %v744
        %v772 = vpack.c.b16 %v748, %v745
        %v773 = vpack.c.b16 %v749, %v746
        %798 = vmatprep.subr.bf16.mxu0 %v751
        %799 = vmatpush1.bf16.msra.mxu0 %v750
        %800 = vmatprep.subr.bf16.mxu0 %v754
        %801 = vmatpush1.bf16.msra.mxu0 %v753
        %802 = vmatprep.subr.bf16.mxu0 %v757
        %803 = vmatpush1.bf16.msra.mxu0 %v756
        %804 = vmatprep.subr.bf16.mxu0 %v760
        %805 = vmatpush1.bf16.msra.mxu0 %v759
        %806 = vmatprep.subr.bf16.mxu0 %v763
        %807 = vmatpush1.bf16.msra.mxu0 %v762
        %808 = vmatprep.subr.bf16.mxu0 %v766
        %809 = vmatpush1.bf16.msra.mxu0 %v765
        %810 = vmatprep.subr.bf16.mxu0 %v769
        %811 = vmatpush1.bf16.msra.mxu0 %v768
        %812 = vmatprep.subr.bf16.mxu0 %v772
        %813 = vmatpush1.bf16.msra.mxu0 %v771
        %814 = vmatprep.subr.bf16.mxu0 0
        %815 = vmatpush1.bf16.msra.mxu0 0
        %816 = vmatprep.subr.bf16.mxu0 0
        %817 = vmatpush1.bf16.msra.mxu0 0
        %818 = vmatprep.subr.bf16.mxu0 0
        %819 = vmatpush1.bf16.msra.mxu0 0
        %820 = vmatprep.subr.bf16.mxu0 0
        %821 = vmatpush1.bf16.msra.mxu0 0
        %822 = vmatprep.subr.bf16.mxu0 0
        %823 = vmatpush1.bf16.msra.mxu0 0
        %824 = vmatprep.subr.bf16.mxu0 0
        %825 = vmatpush1.bf16.msra.mxu0 0
        %826 = vmatprep.subr.bf16.mxu0 0
        %827 = vmatpush1.bf16.msra.mxu0 0
        %828 = vmatprep.subr.bf16.mxu0 0
        %829 = vmatpush1.bf16.msra.mxu0 0
        %830 = vmatprep.mubr.bf16.mxu0 0
        %831 = vmatmul.mubr.bf16.gmra.mrb[0].mxu0 %v625
        %v832 = vpop.f32.mrb[0].mxu0
        %v833 = vadd.f32 %v661, %v832
        %v834 = vpop.f32.mrb[0].mxu0
        %v835 = vadd.f32 %v665, %v834
        %v836 = vpop.f32.mrb[0].mxu0
        %v837 = vpop.f32.mrb[0].mxu0
        %838 = vdwg.mxu0
        %839 = vmatprep.subr.bf16.mxu0 0
        %840 = vmatpush1.bf16.msra.mxu0 %v752
        %841 = vmatprep.subr.bf16.mxu0 0
        %842 = vmatpush1.bf16.msra.mxu0 %v755
        %843 = vmatprep.subr.bf16.mxu0 0
        %844 = vmatpush1.bf16.msra.mxu0 %v758
        %845 = vmatprep.subr.bf16.mxu0 0
        %846 = vmatpush1.bf16.msra.mxu0 %v761
        %847 = vmatprep.subr.bf16.mxu0 0
        %848 = vmatpush1.bf16.msra.mxu0 %v764
        %849 = vmatprep.subr.bf16.mxu0 0
        %850 = vmatpush1.bf16.msra.mxu0 %v767
        %851 = vmatprep.subr.bf16.mxu0 0
        %852 = vmatpush1.bf16.msra.mxu0 %v770
        %853 = vmatprep.subr.bf16.mxu0 0
        %854 = vmatpush1.bf16.msra.mxu0 %v773
        %855 = vmatprep.subr.bf16.mxu0 0
        %856 = vmatpush1.bf16.msra.mxu0 0
        %857 = vmatprep.subr.bf16.mxu0 0
        %858 = vmatpush1.bf16.msra.mxu0 0
        %859 = vmatprep.subr.bf16.mxu0 0
        %860 = vmatpush1.bf16.msra.mxu0 0
        %861 = vmatprep.subr.bf16.mxu0 0
        %862 = vmatpush1.bf16.msra.mxu0 0
        %863 = vmatprep.subr.bf16.mxu0 0
        %864 = vmatpush1.bf16.msra.mxu0 0
        %865 = vmatprep.subr.bf16.mxu0 0
        %866 = vmatpush1.bf16.msra.mxu0 0
        %867 = vmatprep.subr.bf16.mxu0 0
        %868 = vmatpush1.bf16.msra.mxu0 0
        %869 = vmatprep.subr.bf16.mxu0 0
        %870 = vmatpush1.bf16.msra.mxu0 0
        %871 = vmatprep.mubr.bf16.mxu0 0
        %872 = vmatmul.mubr.bf16.gmra.mrb[0].mxu0 %v625
        %v873 = vpop.f32.mrb[0].mxu0
        %v874 = vadd.f32 %v669, %v873
        %v875 = vpop.f32.mrb[0].mxu0
        %v876 = vpop.f32.mrb[0].mxu0
        %v877 = vpop.f32.mrb[0].mxu0
        %878 = vdwg.mxu0
        %v879 = vpack.c.bf16 %v833, %v833
        %v880 = vpack.c.bf16 %v835, %v835
        %v881 = vpack.c.bf16 %v874, %v874
        %883 = vrot.lane.b32.xlu0 %v879, 96
        %v884 = vpop.permute.xlu0 %883
        %885 = vrot.lane.b32.xlu0 %v879, 64
        %v886 = vpop.permute.xlu0 %885
        %887 = vrot.lane.b32.xlu0 %v879, 32
        %v888 = vpop.permute.xlu0 %887
        %890 = vrot.lane.b32.xlu0 %v880, 96
        %v891 = vpop.permute.xlu0 %890
        %893 = vrot.lane.b32.xlu0 %v880, 64
        %v894 = vpop.permute.xlu0 %893
        %896 = vrot.lane.b32.xlu0 %v880, 32
        %v897 = vpop.permute.xlu0 %896
        %900 = vrot.lane.b32.xlu0 %v881, 96
        %v901 = vpop.permute.xlu0 %900
        %903 = vrot.lane.b32.xlu0 %v881, 64
        %v904 = vpop.permute.xlu0 %903
        %906 = vrot.lane.b32.xlu0 %v881, 32
        %v907 = vpop.permute.xlu0 %906
        %909 = vxpose.xlu0.c.b16.start [1/8] %v880, 128
        %910 = vxpose.xlu0.c.b16.cont [2/8] 0, 128
        %911 = vxpose.xlu0.c.b16.cont [3/8] 0, 128
        %912 = vxpose.xlu0.c.b16.cont [4/8] 0, 128
        %913 = vxpose.xlu0.c.b16.cont [5/8] 0, 128
        %914 = vxpose.xlu0.c.b16.cont [6/8] 0, 128
        %915 = vxpose.xlu0.c.b16.cont [7/8] 0, 128
        %916 = vxpose.xlu0.c.b16.end [8/8] 0, 128
        %v917 = vpop.trf.xlu0
        %v918 = vpop.trf.xlu0
        %v919 = vpop.trf.xlu0
        %v920 = vpop.trf.xlu0
        %v921 = vpop.trf.xlu0
        %v922 = vpop.trf.xlu0
        %v923 = vpop.trf.xlu0
        %v924 = vpop.trf.xlu0
        %925 = vxpose.xlu0.c.b16.start [1/8] %v891, 128
        %926 = vxpose.xlu0.c.b16.cont [2/8] 0, 128
        %927 = vxpose.xlu0.c.b16.cont [3/8] 0, 128
        %928 = vxpose.xlu0.c.b16.cont [4/8] 0, 128
        %929 = vxpose.xlu0.c.b16.cont [5/8] 0, 128
        %930 = vxpose.xlu0.c.b16.cont [6/8] 0, 128
        %931 = vxpose.xlu0.c.b16.cont [7/8] 0, 128
        %932 = vxpose.xlu0.c.b16.end [8/8] 0, 128
        %v933 = vpop.trf.xlu0
        %v934 = vpop.trf.xlu0
        %v935 = vpop.trf.xlu0
        %v936 = vpop.trf.xlu0
        %v937 = vpop.trf.xlu0
        %v938 = vpop.trf.xlu0
        %v939 = vpop.trf.xlu0
        %v940 = vpop.trf.xlu0
        %941 = vxpose.xlu0.c.b16.start [1/8] %v894, 128
        %942 = vxpose.xlu0.c.b16.cont [2/8] 0, 128
        %943 = vxpose.xlu0.c.b16.cont [3/8] 0, 128
        %944 = vxpose.xlu0.c.b16.cont [4/8] 0, 128
        %945 = vxpose.xlu0.c.b16.cont [5/8] 0, 128
        %946 = vxpose.xlu0.c.b16.cont [6/8] 0, 128
        %947 = vxpose.xlu0.c.b16.cont [7/8] 0, 128
        %948 = vxpose.xlu0.c.b16.end [8/8] 0, 128
        %v949 = vpop.trf.xlu0
        %v950 = vpop.trf.xlu0
        %v951 = vpop.trf.xlu0
        %v952 = vpop.trf.xlu0
        %v953 = vpop.trf.xlu0
        %v954 = vpop.trf.xlu0
        %v955 = vpop.trf.xlu0
        %v956 = vpop.trf.xlu0
        %957 = vxpose.xlu0.c.b16.start [1/8] %v897, 128
        %958 = vxpose.xlu0.c.b16.cont [2/8] 0, 128
        %959 = vxpose.xlu0.c.b16.cont [3/8] 0, 128
        %960 = vxpose.xlu0.c.b16.cont [4/8] 0, 128
        %961 = vxpose.xlu0.c.b16.cont [5/8] 0, 128
        %962 = vxpose.xlu0.c.b16.cont [6/8] 0, 128
        %963 = vxpose.xlu0.c.b16.cont [7/8] 0, 128
        %964 = vxpose.xlu0.c.b16.end [8/8] 0, 128
        %v965 = vpop.trf.xlu0
        %v966 = vpop.trf.xlu0
        %v967 = vpop.trf.xlu0
        %v968 = vpop.trf.xlu0
        %v969 = vpop.trf.xlu0
        %v970 = vpop.trf.xlu0
        %v971 = vpop.trf.xlu0
        %v972 = vpop.trf.xlu0
        %vm973 = vcmask 261120
        %v975 = vsel %vm973, %v879, 0
        %977 = vmatprep.subr.bf16.mxu0 0
        %978 = vmatpush1.bf16.msra.mxu0 %v917
        %979 = vmatprep.subr.bf16.mxu0 0
        %980 = vmatpush1.bf16.msra.mxu0 %v918
        %981 = vmatprep.subr.bf16.mxu0 0
        %982 = vmatpush1.bf16.msra.mxu0 0
        %983 = vmatprep.subr.bf16.mxu0 0
        %984 = vmatpush1.bf16.msra.mxu0 0
        %985 = vmatprep.subr.bf16.mxu0 0
        %986 = vmatpush1.bf16.msra.mxu0 0
        %987 = vmatprep.subr.bf16.mxu0 0
        %988 = vmatpush1.bf16.msra.mxu0 0
        %989 = vmatprep.subr.bf16.mxu0 0
        %990 = vmatpush1.bf16.msra.mxu0 0
        %991 = vmatprep.subr.bf16.mxu0 0
        %992 = vmatpush1.bf16.msra.mxu0 0
        %993 = vmatprep.subr.bf16.mxu0 0
        %994 = vmatpush1.bf16.msra.mxu0 0
        %995 = vmatprep.subr.bf16.mxu0 0
        %996 = vmatpush1.bf16.msra.mxu0 0
        %997 = vmatprep.subr.bf16.mxu0 0
        %998 = vmatpush1.bf16.msra.mxu0 0
        %999 = vmatprep.subr.bf16.mxu0 0
        %1000 = vmatpush1.bf16.msra.mxu0 0
        %1001 = vmatprep.subr.bf16.mxu0 0
        %1002 = vmatpush1.bf16.msra.mxu0 0
        %1003 = vmatprep.subr.bf16.mxu0 0
        %1004 = vmatpush1.bf16.msra.mxu0 0
        %1005 = vmatprep.subr.bf16.mxu0 0
        %1006 = vmatpush1.bf16.msra.mxu0 0
        %1007 = vmatprep.subr.bf16.mxu0 0
        %1008 = vmatpush1.bf16.msra.mxu0 0
        %1009 = vmatprep.mubr.bf16.mxu0 0
        %1010 = vmatmul.mubr.bf16.gmra.mrb[0].mxu0 %v975
        %v1011 = vpop.f32.mrb[0].mxu0
        %v1012 = vadd.f32 0.0, %v1011
        %v1013 = vpop.f32.mrb[0].mxu0
        %v1014 = vpop.f32.mrb[0].mxu0
        %v1015 = vpop.f32.mrb[0].mxu0
        %1016 = vdwg.mxu0
        %v1018 = vsel %vm973, %v884, 0
        %1020 = vmatprep.subr.bf16.mxu0 0
        %1021 = vmatpush1.bf16.msra.mxu0 %v933
        %1022 = vmatprep.subr.bf16.mxu0 0
        %1023 = vmatpush1.bf16.msra.mxu0 %v934
        %1024 = vmatprep.subr.bf16.mxu0 0
        %1025 = vmatpush1.bf16.msra.mxu0 0
        %1026 = vmatprep.subr.bf16.mxu0 0
        %1027 = vmatpush1.bf16.msra.mxu0 0
        %1028 = vmatprep.subr.bf16.mxu0 0
        %1029 = vmatpush1.bf16.msra.mxu0 0
        %1030 = vmatprep.subr.bf16.mxu0 0
        %1031 = vmatpush1.bf16.msra.mxu0 0
        %1032 = vmatprep.subr.bf16.mxu0 0
        %1033 = vmatpush1.bf16.msra.mxu0 0
        %1034 = vmatprep.subr.bf16.mxu0 0
        %1035 = vmatpush1.bf16.msra.mxu0 0
        %1036 = vmatprep.subr.bf16.mxu0 0
        %1037 = vmatpush1.bf16.msra.mxu0 0
        %1038 = vmatprep.subr.bf16.mxu0 0
        %1039 = vmatpush1.bf16.msra.mxu0 0
        %1040 = vmatprep.subr.bf16.mxu0 0
        %1041 = vmatpush1.bf16.msra.mxu0 0
        %1042 = vmatprep.subr.bf16.mxu0 0
        %1043 = vmatpush1.bf16.msra.mxu0 0
        %1044 = vmatprep.subr.bf16.mxu0 0
        %1045 = vmatpush1.bf16.msra.mxu0 0
        %1046 = vmatprep.subr.bf16.mxu0 0
        %1047 = vmatpush1.bf16.msra.mxu0 0
        %1048 = vmatprep.subr.bf16.mxu0 0
        %1049 = vmatpush1.bf16.msra.mxu0 0
        %1050 = vmatprep.subr.bf16.mxu0 0
        %1051 = vmatpush1.bf16.msra.mxu0 0
        %1052 = vmatprep.mubr.bf16.mxu0 0
        %1053 = vmatmul.mubr.bf16.gmra.mrb[0].mxu0 %v1018
        %v1054 = vpop.f32.mrb[0].mxu0
        %v1055 = vadd.f32 0.0, %v1054
        %v1056 = vpop.f32.mrb[0].mxu0
        %v1057 = vpop.f32.mrb[0].mxu0
        %v1058 = vpop.f32.mrb[0].mxu0
        %1059 = vdwg.mxu0
        %v1061 = vsel %vm973, %v886, 0
        %1063 = vmatprep.subr.bf16.mxu0 0
        %1064 = vmatpush1.bf16.msra.mxu0 %v949
        %1065 = vmatprep.subr.bf16.mxu0 0
        %1066 = vmatpush1.bf16.msra.mxu0 %v950
        %1067 = vmatprep.subr.bf16.mxu0 0
        %1068 = vmatpush1.bf16.msra.mxu0 0
        %1069 = vmatprep.subr.bf16.mxu0 0
        %1070 = vmatpush1.bf16.msra.mxu0 0
        %1071 = vmatprep.subr.bf16.mxu0 0
        %1072 = vmatpush1.bf16.msra.mxu0 0
        %1073 = vmatprep.subr.bf16.mxu0 0
        %1074 = vmatpush1.bf16.msra.mxu0 0
        %1075 = vmatprep.subr.bf16.mxu0 0
        %1076 = vmatpush1.bf16.msra.mxu0 0
        %1077 = vmatprep.subr.bf16.mxu0 0
        %1078 = vmatpush1.bf16.msra.mxu0 0
        %1079 = vmatprep.subr.bf16.mxu0 0
        %1080 = vmatpush1.bf16.msra.mxu0 0
        %1081 = vmatprep.subr.bf16.mxu0 0
        %1082 = vmatpush1.bf16.msra.mxu0 0
        %1083 = vmatprep.subr.bf16.mxu0 0
        %1084 = vmatpush1.bf16.msra.mxu0 0
        %1085 = vmatprep.subr.bf16.mxu0 0
        %1086 = vmatpush1.bf16.msra.mxu0 0
        %1087 = vmatprep.subr.bf16.mxu0 0
        %1088 = vmatpush1.bf16.msra.mxu0 0
        %1089 = vmatprep.subr.bf16.mxu0 0
        %1090 = vmatpush1.bf16.msra.mxu0 0
        %1091 = vmatprep.subr.bf16.mxu0 0
        %1092 = vmatpush1.bf16.msra.mxu0 0
        %1093 = vmatprep.subr.bf16.mxu0 0
        %1094 = vmatpush1.bf16.msra.mxu0 0
        %1095 = vmatprep.mubr.bf16.mxu0 0
        %1096 = vmatmul.mubr.bf16.gmra.mrb[0].mxu0 %v1061
        %v1097 = vpop.f32.mrb[0].mxu0
        %v1098 = vadd.f32 0.0, %v1097
        %v1099 = vpop.f32.mrb[0].mxu0
        %v1100 = vpop.f32.mrb[0].mxu0
        %v1101 = vpop.f32.mrb[0].mxu0
        %1102 = vdwg.mxu0
        %v1104 = vsel %vm973, %v888, 0
        %1106 = vmatprep.subr.bf16.mxu0 0
        %1107 = vmatpush1.bf16.msra.mxu0 %v965
        %1108 = vmatprep.subr.bf16.mxu0 0
        %1109 = vmatpush1.bf16.msra.mxu0 %v966
        %1110 = vmatprep.subr.bf16.mxu0 0
        %1111 = vmatpush1.bf16.msra.mxu0 0
        %1112 = vmatprep.subr.bf16.mxu0 0
        %1113 = vmatpush1.bf16.msra.mxu0 0
        %1114 = vmatprep.subr.bf16.mxu0 0
        %1115 = vmatpush1.bf16.msra.mxu0 0
        %1116 = vmatprep.subr.bf16.mxu0 0
        %1117 = vmatpush1.bf16.msra.mxu0 0
        %1118 = vmatprep.subr.bf16.mxu0 0
        %1119 = vmatpush1.bf16.msra.mxu0 0
        %1120 = vmatprep.subr.bf16.mxu0 0
        %1121 = vmatpush1.bf16.msra.mxu0 0
        %1122 = vmatprep.subr.bf16.mxu0 0
        %1123 = vmatpush1.bf16.msra.mxu0 0
        %1124 = vmatprep.subr.bf16.mxu0 0
        %1125 = vmatpush1.bf16.msra.mxu0 0
        %1126 = vmatprep.subr.bf16.mxu0 0
        %1127 = vmatpush1.bf16.msra.mxu0 0
        %1128 = vmatprep.subr.bf16.mxu0 0
        %1129 = vmatpush1.bf16.msra.mxu0 0
        %1130 = vmatprep.subr.bf16.mxu0 0
        %1131 = vmatpush1.bf16.msra.mxu0 0
        %1132 = vmatprep.subr.bf16.mxu0 0
        %1133 = vmatpush1.bf16.msra.mxu0 0
        %1134 = vmatprep.subr.bf16.mxu0 0
        %1135 = vmatpush1.bf16.msra.mxu0 0
        %1136 = vmatprep.subr.bf16.mxu0 0
        %1137 = vmatpush1.bf16.msra.mxu0 0
        %1138 = vmatprep.mubr.bf16.mxu0 0
        %1139 = vmatmul.mubr.bf16.gmra.mrb[0].mxu0 %v1104
        %v1140 = vpop.f32.mrb[0].mxu0
        %v1141 = vadd.f32 0.0, %v1140
        %v1142 = vpop.f32.mrb[0].mxu0
        %v1143 = vpop.f32.mrb[0].mxu0
        %v1144 = vpop.f32.mrb[0].mxu0
        %1145 = vdwg.mxu0
        %vm1146 = vcmask 36864
        %v1147 = vsel %vm1146, %v1012, -inf
        %1148 = vmax.xlane.f32.xlu0 %v1147
        %v1149 = vpop.xlane.xlu0 %1148
        %v1150 = vsel %vm1146, %v1055, -inf
        %1151 = vmax.xlane.f32.xlu0 %v1150
        %v1152 = vpop.xlane.xlu0 %1151
        %v1153 = vsel %vm1146, %v1098, -inf
        %1154 = vmax.xlane.f32.xlu0 %v1153
        %v1155 = vpop.xlane.xlu0 %1154
        %v1156 = vsel %vm1146, %v1141, -inf
        %1157 = vmax.xlane.f32.xlu0 %v1156
        %v1158 = vpop.xlane.xlu0 %1157
        %v1159 = vsub.f32 %v1012, %v1149
        %v1160 = vsub.f32 %v1055, %v1152
        %v1161 = vsub.f32 %v1098, %v1155
        %v1162 = vsub.f32 %v1141, %v1158
        %v1163 = vmul.f32 %v1159, 1.442695
        %v1164 = vpow.pop %v1163
        %v1165 = vmul.f32 %v1160, 1.442695
        %v1166 = vpow.pop %v1165
        %v1167 = vmul.f32 %v1161, 1.442695
        %v1168 = vpow.pop %v1167
        %v1169 = vmul.f32 %v1162, 1.442695
        %v1170 = vpow.pop %v1169
        %v1171 = vsel %vm1146, %v1164, 0.0
        %1172 = vadd.xlane.f32.xlu0 %v1171
        %v1173 = vpop.xlane.xlu0 %1172
        %v1174 = vsel %vm1146, %v1166, 0.0
        %1175 = vadd.xlane.f32.xlu0 %v1174
        %v1176 = vpop.xlane.xlu0 %1175
        %v1177 = vsel %vm1146, %v1168, 0.0
        %1178 = vadd.xlane.f32.xlu0 %v1177
        %v1179 = vpop.xlane.xlu0 %1178
        %v1180 = vsel %vm1146, %v1170, 0.0
        %1181 = vadd.xlane.f32.xlu0 %v1180
        %v1182 = vpop.xlane.xlu0 %1181
        %v1187 = vlaneseq
        %v1188 = vand.u32 %v1187, 127
        %v1189 = vlaneseq
        %v1190 = vshrl.u32 %v1189, 7
        %v1191 = vsub.s32 %v1188, %v1190
        %v1192 = vrot.slane %v1173, %v1191
        %v1193 = vlaneseq
        %v1194 = vshrl.u32 %v1193, 7
        %v1195 = vsub.s32 %v1188, %v1194
        %v1196 = vrot.slane %v1176, %v1195
        %v1197 = vlaneseq
        %v1198 = vshrl.u32 %v1197, 7
        %v1199 = vsub.s32 %v1188, %v1198
        %v1200 = vrot.slane %v1179, %v1199
        %v1201 = vlaneseq
        %v1202 = vshrl.u32 %v1201, 7
        %v1203 = vsub.s32 %v1188, %v1202
        %v1204 = vrot.slane %v1182, %v1203
        %vm1205 = vcmask 1041409
        %v1206 = vsel %vm1205, %v1196, %v1192
        %vm1207 = vcmask 1042434
        %v1208 = vsel %vm1207, %v1200, %v1206
        %vm1209 = vcmask 1043459
        %v1210 = vsel %vm1209, %v1204, %v1208
        %1212 = vxpose.xlu0.b32.start [1/16] %v1210, 128
        %1213 = vxpose.xlu0.b32.cont [2/16] 0.0, 128
        %1214 = vxpose.xlu0.b32.cont [3/16] 0.0, 128
        %1215 = vxpose.xlu0.b32.cont [4/16] 0.0, 128
        %1216 = vxpose.xlu0.b32.cont [5/16] 0.0, 128
        %1217 = vxpose.xlu0.b32.cont [6/16] 0.0, 128
        %1218 = vxpose.xlu0.b32.cont [7/16] 0.0, 128
        %1219 = vxpose.xlu0.b32.cont [8/16] 0.0, 128
        %1220 = vxpose.xlu0.b32.cont [9/16] 0.0, 128
        %1221 = vxpose.xlu0.b32.cont [10/16] 0.0, 128
        %1222 = vxpose.xlu0.b32.cont [11/16] 0.0, 128
        %1223 = vxpose.xlu0.b32.cont [12/16] 0.0, 128
        %1224 = vxpose.xlu0.b32.cont [13/16] 0.0, 128
        %1225 = vxpose.xlu0.b32.cont [14/16] 0.0, 128
        %1226 = vxpose.xlu0.b32.cont [15/16] 0.0, 128
        %1227 = vxpose.xlu0.b32.end [16/16] 0.0, 128
        %v1228 = vpop.trf.xlu0
        %v1229 = vpop.trf.xlu0
        %v1230 = vpop.trf.xlu0
        %v1231 = vpop.trf.xlu0
        %v1232 = vpop.trf.xlu0
        %v1233 = vpop.trf.xlu0
        %v1234 = vpop.trf.xlu0
        %v1235 = vpop.trf.xlu0
        %v1236 = vpop.trf.xlu0
        %v1237 = vpop.trf.xlu0
        %v1238 = vpop.trf.xlu0
        %v1239 = vpop.trf.xlu0
        %v1240 = vpop.trf.xlu0
        %v1241 = vpop.trf.xlu0
        %v1242 = vpop.trf.xlu0
        %v1243 = vpop.trf.xlu0
        %v1244 = vrcp.pop %v1228
        %v1245 = vpack.c.bf16 %v1164, %v1164
        %v1246 = vpack.c.bf16 %v1166, %v1166
        %v1247 = vpack.c.bf16 %v1168, %v1168
        %v1248 = vpack.c.bf16 %v1170, %v1170
        %1249 = vxpose.xlu0.c.b16.start [1/8] %v881, 128
        %1250 = vxpose.xlu0.c.b16.cont [2/8] 0, 128
        %1251 = vxpose.xlu0.c.b16.cont [3/8] 0, 128
        %1252 = vxpose.xlu0.c.b16.cont [4/8] 0, 128
        %1253 = vxpose.xlu0.c.b16.cont [5/8] 0, 128
        %1254 = vxpose.xlu0.c.b16.cont [6/8] 0, 128
        %1255 = vxpose.xlu0.c.b16.cont [7/8] 0, 128
        %1256 = vxpose.xlu0.c.b16.end [8/8] 0, 128
        %v1257 = vpop.trf.xlu0
        %v1258 = vpop.trf.xlu0
        %v1259 = vpop.trf.xlu0
        %v1260 = vpop.trf.xlu0
        %v1261 = vpop.trf.xlu0
        %v1262 = vpop.trf.xlu0
        %v1263 = vpop.trf.xlu0
        %v1264 = vpop.trf.xlu0
        %1265 = vxpose.xlu0.c.b16.start [1/8] %v901, 128
        %1266 = vxpose.xlu0.c.b16.cont [2/8] 0, 128
        %1267 = vxpose.xlu0.c.b16.cont [3/8] 0, 128
        %1268 = vxpose.xlu0.c.b16.cont [4/8] 0, 128
        %1269 = vxpose.xlu0.c.b16.cont [5/8] 0, 128
        %1270 = vxpose.xlu0.c.b16.cont [6/8] 0, 128
        %1271 = vxpose.xlu0.c.b16.cont [7/8] 0, 128
        %1272 = vxpose.xlu0.c.b16.end [8/8] 0, 128
        %v1273 = vpop.trf.xlu0
        %v1274 = vpop.trf.xlu0
        %v1275 = vpop.trf.xlu0
        %v1276 = vpop.trf.xlu0
        %v1277 = vpop.trf.xlu0
        %v1278 = vpop.trf.xlu0
        %v1279 = vpop.trf.xlu0
        %v1280 = vpop.trf.xlu0
        %1281 = vxpose.xlu0.c.b16.start [1/8] %v904, 128
        %1282 = vxpose.xlu0.c.b16.cont [2/8] 0, 128
        %1283 = vxpose.xlu0.c.b16.cont [3/8] 0, 128
        %1284 = vxpose.xlu0.c.b16.cont [4/8] 0, 128
        %1285 = vxpose.xlu0.c.b16.cont [5/8] 0, 128
        %1286 = vxpose.xlu0.c.b16.cont [6/8] 0, 128
        %1287 = vxpose.xlu0.c.b16.cont [7/8] 0, 128
        %1288 = vxpose.xlu0.c.b16.end [8/8] 0, 128
        %v1289 = vpop.trf.xlu0
        %v1290 = vpop.trf.xlu0
        %v1291 = vpop.trf.xlu0
        %v1292 = vpop.trf.xlu0
        %v1293 = vpop.trf.xlu0
        %v1294 = vpop.trf.xlu0
        %v1295 = vpop.trf.xlu0
        %v1296 = vpop.trf.xlu0
        %1297 = vxpose.xlu0.c.b16.start [1/8] %v907, 128
        %1298 = vxpose.xlu0.c.b16.cont [2/8] 0, 128
        %1299 = vxpose.xlu0.c.b16.cont [3/8] 0, 128
        %1300 = vxpose.xlu0.c.b16.cont [4/8] 0, 128
        %1301 = vxpose.xlu0.c.b16.cont [5/8] 0, 128
        %1302 = vxpose.xlu0.c.b16.cont [6/8] 0, 128
        %1303 = vxpose.xlu0.c.b16.cont [7/8] 0, 128
        %1304 = vxpose.xlu0.c.b16.end [8/8] 0, 128
        %v1305 = vpop.trf.xlu0
        %v1306 = vpop.trf.xlu0
        %v1307 = vpop.trf.xlu0
        %v1308 = vpop.trf.xlu0
        %v1309 = vpop.trf.xlu0
        %v1310 = vpop.trf.xlu0
        %v1311 = vpop.trf.xlu0
        %v1312 = vpop.trf.xlu0
        %vm1313 = vcmask 39936
        %v1315 = vsel %vm1313, %v1257, 0
        %v1318 = vsel %vm1313, %v1258, 0
        %v1321 = vsel %vm1313, %v1245, 0
        %1323 = vmatprep.subr.bf16.mxu0 0
        %1324 = vmatpush1.bf16.xpose.msra.mxu0 %v1321
        %1325 = vmatprep.subr.bf16.mxu0 0
        %1326 = vmatpush1.bf16.xpose.msra.mxu0 0
        %1327 = vmatprep.subr.bf16.mxu0 0
        %1328 = vmatpush1.bf16.xpose.msra.mxu0 0
        %1329 = vmatprep.subr.bf16.mxu0 0
        %1330 = vmatpush1.bf16.xpose.msra.mxu0 0
        %1331 = vmatprep.subr.bf16.mxu0 0
        %1332 = vmatpush1.bf16.xpose.msra.mxu0 0
        %1333 = vmatprep.subr.bf16.mxu0 0
        %1334 = vmatpush1.bf16.xpose.msra.mxu0 0
        %1335 = vmatprep.subr.bf16.mxu0 0
        %1336 = vmatpush1.bf16.xpose.msra.mxu0 0
        %1337 = vmatprep.subr.bf16.mxu0 0
        %1338 = vmatpush1.bf16.xpose.msra.mxu0 0
        %1339 = vmatprep.subr.bf16.mxu0 0
        %1340 = vmatpush1.bf16.xpose.msra.mxu0 0
        %1341 = vmatprep.subr.bf16.mxu0 0
        %1342 = vmatpush1.bf16.xpose.msra.mxu0 0
        %1343 = vmatprep.subr.bf16.mxu0 0
        %1344 = vmatpush1.bf16.xpose.msra.mxu0 0
        %1345 = vmatprep.subr.bf16.mxu0 0
        %1346 = vmatpush1.bf16.xpose.msra.mxu0 0
        %1347 = vmatprep.subr.bf16.mxu0 0
        %1348 = vmatpush1.bf16.xpose.msra.mxu0 0
        %1349 = vmatprep.subr.bf16.mxu0 0
        %1350 = vmatpush1.bf16.xpose.msra.mxu0 0
        %1351 = vmatprep.subr.bf16.mxu0 0
        %1352 = vmatpush1.bf16.xpose.msra.mxu0 0
        %1353 = vmatprep.subr.bf16.mxu0 0
        %1354 = vmatpush1.bf16.xpose.msra.mxu0 0
        %1355 = vmatprep.mubr.bf16.mxu0 0
        %1356 = vmatmul.mubr.bf16.gmra.mrb[0].mxu0 %v1315
        %v1357 = vpop.f32.mrb[0].mxu0
        %v1358 = vadd.f32 0.0, %v1357
        %v1359 = vpop.f32.mrb[0].mxu0
        %v1360 = vpop.f32.mrb[0].mxu0
        %v1361 = vadd.f32 0.0, %v1360
        %v1362 = vpop.f32.mrb[0].mxu0
        %1363 = vmatprep.mubr.bf16.mxu0 0
        %1364 = vmatmul.mubr.bf16.gmra.mrb[0].mxu0 %v1318
        %v1365 = vpop.f32.mrb[0].mxu0
        %v1366 = vadd.f32 0.0, %v1365
        %v1367 = vpop.f32.mrb[0].mxu0
        %v1368 = vpop.f32.mrb[0].mxu0
        %v1369 = vadd.f32 0.0, %v1368
        %v1370 = vpop.f32.mrb[0].mxu0
        %1371 = vdwg.mxu0
        %v1373 = vsel %vm1313, %v1273, 0
        %v1376 = vsel %vm1313, %v1274, 0
        %v1379 = vsel %vm1313, %v1246, 0
        %1381 = vmatprep.subr.bf16.mxu0 0
        %1382 = vmatpush1.bf16.xpose.msra.mxu0 %v1379
        %1383 = vmatprep.subr.bf16.mxu0 0
        %1384 = vmatpush1.bf16.xpose.msra.mxu0 0
        %1385 = vmatprep.subr.bf16.mxu0 0
        %1386 = vmatpush1.bf16.xpose.msra.mxu0 0
        %1387 = vmatprep.subr.bf16.mxu0 0
        %1388 = vmatpush1.bf16.xpose.msra.mxu0 0
        %1389 = vmatprep.subr.bf16.mxu0 0
        %1390 = vmatpush1.bf16.xpose.msra.mxu0 0
        %1391 = vmatprep.subr.bf16.mxu0 0
        %1392 = vmatpush1.bf16.xpose.msra.mxu0 0
        %1393 = vmatprep.subr.bf16.mxu0 0
        %1394 = vmatpush1.bf16.xpose.msra.mxu0 0
        %1395 = vmatprep.subr.bf16.mxu0 0
        %1396 = vmatpush1.bf16.xpose.msra.mxu0 0
        %1397 = vmatprep.subr.bf16.mxu0 0
        %1398 = vmatpush1.bf16.xpose.msra.mxu0 0
        %1399 = vmatprep.subr.bf16.mxu0 0
        %1400 = vmatpush1.bf16.xpose.msra.mxu0 0
        %1401 = vmatprep.subr.bf16.mxu0 0
        %1402 = vmatpush1.bf16.xpose.msra.mxu0 0
        %1403 = vmatprep.subr.bf16.mxu0 0
        %1404 = vmatpush1.bf16.xpose.msra.mxu0 0
        %1405 = vmatprep.subr.bf16.mxu0 0
        %1406 = vmatpush1.bf16.xpose.msra.mxu0 0
        %1407 = vmatprep.subr.bf16.mxu0 0
        %1408 = vmatpush1.bf16.xpose.msra.mxu0 0
        %1409 = vmatprep.subr.bf16.mxu0 0
        %1410 = vmatpush1.bf16.xpose.msra.mxu0 0
        %1411 = vmatprep.subr.bf16.mxu0 0
        %1412 = vmatpush1.bf16.xpose.msra.mxu0 0
        %1413 = vmatprep.mubr.bf16.mxu0 0
        %1414 = vmatmul.mubr.bf16.gmra.mrb[0].mxu0 %v1373
        %v1415 = vpop.f32.mrb[0].mxu0
        %v1416 = vadd.f32 0.0, %v1415
        %v1417 = vpop.f32.mrb[0].mxu0
        %v1418 = vpop.f32.mrb[0].mxu0
        %v1419 = vadd.f32 0.0, %v1418
        %v1420 = vpop.f32.mrb[0].mxu0
        %1421 = vmatprep.mubr.bf16.mxu0 0
        %1422 = vmatmul.mubr.bf16.gmra.mrb[0].mxu0 %v1376
        %v1423 = vpop.f32.mrb[0].mxu0
        %v1424 = vadd.f32 0.0, %v1423
        %v1425 = vpop.f32.mrb[0].mxu0
        %v1426 = vpop.f32.mrb[0].mxu0
        %v1427 = vadd.f32 0.0, %v1426
        %v1428 = vpop.f32.mrb[0].mxu0
        %1429 = vdwg.mxu0
        %v1431 = vsel %vm1313, %v1289, 0
        %v1434 = vsel %vm1313, %v1290, 0
        %v1437 = vsel %vm1313, %v1247, 0
        %1439 = vmatprep.subr.bf16.mxu0 0
        %1440 = vmatpush1.bf16.xpose.msra.mxu0 %v1437
        %1441 = vmatprep.subr.bf16.mxu0 0
        %1442 = vmatpush1.bf16.xpose.msra.mxu0 0
        %1443 = vmatprep.subr.bf16.mxu0 0
        %1444 = vmatpush1.bf16.xpose.msra.mxu0 0
        %1445 = vmatprep.subr.bf16.mxu0 0
        %1446 = vmatpush1.bf16.xpose.msra.mxu0 0
        %1447 = vmatprep.subr.bf16.mxu0 0
        %1448 = vmatpush1.bf16.xpose.msra.mxu0 0
        %1449 = vmatprep.subr.bf16.mxu0 0
        %1450 = vmatpush1.bf16.xpose.msra.mxu0 0
        %1451 = vmatprep.subr.bf16.mxu0 0
        %1452 = vmatpush1.bf16.xpose.msra.mxu0 0
        %1453 = vmatprep.subr.bf16.mxu0 0
        %1454 = vmatpush1.bf16.xpose.msra.mxu0 0
        %1455 = vmatprep.subr.bf16.mxu0 0
        %1456 = vmatpush1.bf16.xpose.msra.mxu0 0
        %1457 = vmatprep.subr.bf16.mxu0 0
        %1458 = vmatpush1.bf16.xpose.msra.mxu0 0
        %1459 = vmatprep.subr.bf16.mxu0 0
        %1460 = vmatpush1.bf16.xpose.msra.mxu0 0
        %1461 = vmatprep.subr.bf16.mxu0 0
        %1462 = vmatpush1.bf16.xpose.msra.mxu0 0
        %1463 = vmatprep.subr.bf16.mxu0 0
        %1464 = vmatpush1.bf16.xpose.msra.mxu0 0
        %1465 = vmatprep.subr.bf16.mxu0 0
        %1466 = vmatpush1.bf16.xpose.msra.mxu0 0
        %1467 = vmatprep.subr.bf16.mxu0 0
        %1468 = vmatpush1.bf16.xpose.msra.mxu0 0
        %1469 = vmatprep.subr.bf16.mxu0 0
        %1470 = vmatpush1.bf16.xpose.msra.mxu0 0
        %1471 = vmatprep.mubr.bf16.mxu0 0
        %1472 = vmatmul.mubr.bf16.gmra.mrb[0].mxu0 %v1431
        %v1473 = vpop.f32.mrb[0].mxu0
        %v1474 = vadd.f32 0.0, %v1473
        %v1475 = vpop.f32.mrb[0].mxu0
        %v1476 = vpop.f32.mrb[0].mxu0
        %v1477 = vadd.f32 0.0, %v1476
        %v1478 = vpop.f32.mrb[0].mxu0
        %1479 = vmatprep.mubr.bf16.mxu0 0
        %1480 = vmatmul.mubr.bf16.gmra.mrb[0].mxu0 %v1434
        %v1481 = vpop.f32.mrb[0].mxu0
        %v1482 = vadd.f32 0.0, %v1481
        %v1483 = vpop.f32.mrb[0].mxu0
        %v1484 = vpop.f32.mrb[0].mxu0
        %v1485 = vadd.f32 0.0, %v1484
        %v1486 = vpop.f32.mrb[0].mxu0
        %1487 = vdwg.mxu0
        %v1489 = vsel %vm1313, %v1305, 0
        %v1492 = vsel %vm1313, %v1306, 0
        %v1495 = vsel %vm1313, %v1248, 0
        %1497 = vmatprep.subr.bf16.mxu0 0
        %1498 = vmatpush1.bf16.xpose.msra.mxu0 %v1495
        %1499 = vmatprep.subr.bf16.mxu0 0
        %1500 = vmatpush1.bf16.xpose.msra.mxu0 0
        %1501 = vmatprep.subr.bf16.mxu0 0
        %1502 = vmatpush1.bf16.xpose.msra.mxu0 0
        %1503 = vmatprep.subr.bf16.mxu0 0
        %1504 = vmatpush1.bf16.xpose.msra.mxu0 0
        %1505 = vmatprep.subr.bf16.mxu0 0
        %1506 = vmatpush1.bf16.xpose.msra.mxu0 0
        %1507 = vmatprep.subr.bf16.mxu0 0
        %1508 = vmatpush1.bf16.xpose.msra.mxu0 0
        %1509 = vmatprep.subr.bf16.mxu0 0
        %1510 = vmatpush1.bf16.xpose.msra.mxu0 0
        %1511 = vmatprep.subr.bf16.mxu0 0
        %1512 = vmatpush1.bf16.xpose.msra.mxu0 0
        %1513 = vmatprep.subr.bf16.mxu0 0
        %1514 = vmatpush1.bf16.xpose.msra.mxu0 0
        %1515 = vmatprep.subr.bf16.mxu0 0
        %1516 = vmatpush1.bf16.xpose.msra.mxu0 0
        %1517 = vmatprep.subr.bf16.mxu0 0
        %1518 = vmatpush1.bf16.xpose.msra.mxu0 0
        %1519 = vmatprep.subr.bf16.mxu0 0
        %1520 = vmatpush1.bf16.xpose.msra.mxu0 0
        %1521 = vmatprep.subr.bf16.mxu0 0
        %1522 = vmatpush1.bf16.xpose.msra.mxu0 0
        %1523 = vmatprep.subr.bf16.mxu0 0
        %1524 = vmatpush1.bf16.xpose.msra.mxu0 0
        %1525 = vmatprep.subr.bf16.mxu0 0
        %1526 = vmatpush1.bf16.xpose.msra.mxu0 0
        %1527 = vmatprep.subr.bf16.mxu0 0
        %1528 = vmatpush1.bf16.xpose.msra.mxu0 0
        %1529 = vmatprep.mubr.bf16.mxu0 0
        %1530 = vmatmul.mubr.bf16.gmra.mrb[0].mxu0 %v1489
        %v1531 = vpop.f32.mrb[0].mxu0
        %v1532 = vadd.f32 0.0, %v1531
        %v1533 = vpop.f32.mrb[0].mxu0
        %v1534 = vpop.f32.mrb[0].mxu0
        %v1535 = vadd.f32 0.0, %v1534
        %v1536 = vpop.f32.mrb[0].mxu0
        %1537 = vmatprep.mubr.bf16.mxu0 0
        %1538 = vmatmul.mubr.bf16.gmra.mrb[0].mxu0 %v1492
        %v1539 = vpop.f32.mrb[0].mxu0
        %v1540 = vadd.f32 0.0, %v1539
        %v1541 = vpop.f32.mrb[0].mxu0
        %v1542 = vpop.f32.mrb[0].mxu0
        %v1543 = vadd.f32 0.0, %v1542
        %v1544 = vpop.f32.mrb[0].mxu0
        %1545 = vdwg.mxu0
        %1546 = vxpose.xlu0.b32.start [1/16] %v1358, 128
        %1547 = vxpose.xlu0.b32.cont [2/16] %v1361, 128
        %1548 = vxpose.xlu0.b32.cont [3/16] %v1366, 128
        %1549 = vxpose.xlu0.b32.cont [4/16] %v1369, 128
        %1550 = vxpose.xlu0.b32.cont [5/16] 0.0, 128
        %1551 = vxpose.xlu0.b32.cont [6/16] 0.0, 128
        %1552 = vxpose.xlu0.b32.cont [7/16] 0.0, 128
        %1553 = vxpose.xlu0.b32.cont [8/16] 0.0, 128
        %1554 = vxpose.xlu0.b32.cont [9/16] 0.0, 128
        %1555 = vxpose.xlu0.b32.cont [10/16] 0.0, 128
        %1556 = vxpose.xlu0.b32.cont [11/16] 0.0, 128
        %1557 = vxpose.xlu0.b32.cont [12/16] 0.0, 128
        %1558 = vxpose.xlu0.b32.cont [13/16] 0.0, 128
        %1559 = vxpose.xlu0.b32.cont [14/16] 0.0, 128
        %1560 = vxpose.xlu0.b32.cont [15/16] 0.0, 128
        %1561 = vxpose.xlu0.b32.end [16/16] 0.0, 128
        %v1562 = vpop.trf.xlu0
        %v1563 = vpop.trf.xlu0
        %v1564 = vpop.trf.xlu0
        %v1565 = vpop.trf.xlu0
        %v1566 = vpop.trf.xlu0
        %v1567 = vpop.trf.xlu0
        %v1568 = vpop.trf.xlu0
        %v1569 = vpop.trf.xlu0
        %v1570 = vpop.trf.xlu0
        %v1571 = vpop.trf.xlu0
        %v1572 = vpop.trf.xlu0
        %v1573 = vpop.trf.xlu0
        %v1574 = vpop.trf.xlu0
        %v1575 = vpop.trf.xlu0
        %v1576 = vpop.trf.xlu0
        %v1577 = vpop.trf.xlu0
        %1578 = vxpose.xlu0.b32.start [1/16] %v1416, 128
        %1579 = vxpose.xlu0.b32.cont [2/16] %v1419, 128
        %1580 = vxpose.xlu0.b32.cont [3/16] %v1424, 128
        %1581 = vxpose.xlu0.b32.cont [4/16] %v1427, 128
        %1582 = vxpose.xlu0.b32.cont [5/16] 0.0, 128
        %1583 = vxpose.xlu0.b32.cont [6/16] 0.0, 128
        %1584 = vxpose.xlu0.b32.cont [7/16] 0.0, 128
        %1585 = vxpose.xlu0.b32.cont [8/16] 0.0, 128
        %1586 = vxpose.xlu0.b32.cont [9/16] 0.0, 128
        %1587 = vxpose.xlu0.b32.cont [10/16] 0.0, 128
        %1588 = vxpose.xlu0.b32.cont [11/16] 0.0, 128
        %1589 = vxpose.xlu0.b32.cont [12/16] 0.0, 128
        %1590 = vxpose.xlu0.b32.cont [13/16] 0.0, 128
        %1591 = vxpose.xlu0.b32.cont [14/16] 0.0, 128
        %1592 = vxpose.xlu0.b32.cont [15/16] 0.0, 128
        %1593 = vxpose.xlu0.b32.end [16/16] 0.0, 128
        %v1594 = vpop.trf.xlu0
        %v1595 = vpop.trf.xlu0
        %v1596 = vpop.trf.xlu0
        %v1597 = vpop.trf.xlu0
        %v1598 = vpop.trf.xlu0
        %v1599 = vpop.trf.xlu0
        %v1600 = vpop.trf.xlu0
        %v1601 = vpop.trf.xlu0
        %v1602 = vpop.trf.xlu0
        %v1603 = vpop.trf.xlu0
        %v1604 = vpop.trf.xlu0
        %v1605 = vpop.trf.xlu0
        %v1606 = vpop.trf.xlu0
        %v1607 = vpop.trf.xlu0
        %v1608 = vpop.trf.xlu0
        %v1609 = vpop.trf.xlu0
        %1610 = vxpose.xlu0.b32.start [1/16] %v1474, 128
        %1611 = vxpose.xlu0.b32.cont [2/16] %v1477, 128
        %1612 = vxpose.xlu0.b32.cont [3/16] %v1482, 128
        %1613 = vxpose.xlu0.b32.cont [4/16] %v1485, 128
        %1614 = vxpose.xlu0.b32.cont [5/16] 0.0, 128
        %1615 = vxpose.xlu0.b32.cont [6/16] 0.0, 128
        %1616 = vxpose.xlu0.b32.cont [7/16] 0.0, 128
        %1617 = vxpose.xlu0.b32.cont [8/16] 0.0, 128
        %1618 = vxpose.xlu0.b32.cont [9/16] 0.0, 128
        %1619 = vxpose.xlu0.b32.cont [10/16] 0.0, 128
        %1620 = vxpose.xlu0.b32.cont [11/16] 0.0, 128
        %1621 = vxpose.xlu0.b32.cont [12/16] 0.0, 128
        %1622 = vxpose.xlu0.b32.cont [13/16] 0.0, 128
        %1623 = vxpose.xlu0.b32.cont [14/16] 0.0, 128
        %1624 = vxpose.xlu0.b32.cont [15/16] 0.0, 128
        %1625 = vxpose.xlu0.b32.end [16/16] 0.0, 128
        %v1626 = vpop.trf.xlu0
        %v1627 = vpop.trf.xlu0
        %v1628 = vpop.trf.xlu0
        %v1629 = vpop.trf.xlu0
        %v1630 = vpop.trf.xlu0
        %v1631 = vpop.trf.xlu0
        %v1632 = vpop.trf.xlu0
        %v1633 = vpop.trf.xlu0
        %v1634 = vpop.trf.xlu0
        %v1635 = vpop.trf.xlu0
        %v1636 = vpop.trf.xlu0
        %v1637 = vpop.trf.xlu0
        %v1638 = vpop.trf.xlu0
        %v1639 = vpop.trf.xlu0
        %v1640 = vpop.trf.xlu0
        %v1641 = vpop.trf.xlu0
        %1642 = vxpose.xlu0.b32.start [1/16] %v1532, 128
        %1643 = vxpose.xlu0.b32.cont [2/16] %v1535, 128
        %1644 = vxpose.xlu0.b32.cont [3/16] %v1540, 128
        %1645 = vxpose.xlu0.b32.cont [4/16] %v1543, 128
        %1646 = vxpose.xlu0.b32.cont [5/16] 0.0, 128
        %1647 = vxpose.xlu0.b32.cont [6/16] 0.0, 128
        %1648 = vxpose.xlu0.b32.cont [7/16] 0.0, 128
        %1649 = vxpose.xlu0.b32.cont [8/16] 0.0, 128
        %1650 = vxpose.xlu0.b32.cont [9/16] 0.0, 128
        %1651 = vxpose.xlu0.b32.cont [10/16] 0.0, 128
        %1652 = vxpose.xlu0.b32.cont [11/16] 0.0, 128
        %1653 = vxpose.xlu0.b32.cont [12/16] 0.0, 128
        %1654 = vxpose.xlu0.b32.cont [13/16] 0.0, 128
        %1655 = vxpose.xlu0.b32.cont [14/16] 0.0, 128
        %1656 = vxpose.xlu0.b32.cont [15/16] 0.0, 128
        %1657 = vxpose.xlu0.b32.end [16/16] 0.0, 128
        %v1658 = vpop.trf.xlu0
        %v1659 = vpop.trf.xlu0
        %v1660 = vpop.trf.xlu0
        %v1661 = vpop.trf.xlu0
        %v1662 = vpop.trf.xlu0
        %v1663 = vpop.trf.xlu0
        %v1664 = vpop.trf.xlu0
        %v1665 = vpop.trf.xlu0
        %v1666 = vpop.trf.xlu0
        %v1667 = vpop.trf.xlu0
        %v1668 = vpop.trf.xlu0
        %v1669 = vpop.trf.xlu0
        %v1670 = vpop.trf.xlu0
        %v1671 = vpop.trf.xlu0
        %v1672 = vpop.trf.xlu0
        %v1673 = vpop.trf.xlu0
        %v1674 = vcombine.low %v1562, %v1626
        %v1675 = vcombine.high %v1562, %v1626
        %v1677 = vunpack.c.l.s4 1983009808
        %v1678 = vunpack.c.0.s8 %v1677
        %v1679 = vlaneseq
        %v1680 = vshrl.u32 %v1679, 7
        %v1681 = vsub.s32 %v1678, %v1680
        %v1682 = vrot.slane %v1674, %v1681
        %v1684 = vunpack.c.l.s4 1983009808
        %v1685 = vunpack.c.0.s8 %v1684
        %v1686 = vlaneseq
        %v1687 = vshrl.u32 %v1686, 7
        %v1688 = vsub.s32 %v1685, %v1687
        %v1689 = vrot.slane %v1675, %v1688
        %v1690 = vcombine.low %v1594, %v1658
        %v1691 = vcombine.high %v1594, %v1658
        %v1693 = vunpack.c.l.s4 1983009808
        %v1694 = vunpack.c.0.s8 %v1693
        %v1695 = vlaneseq
        %v1696 = vshrl.u32 %v1695, 7
        %v1697 = vsub.s32 %v1694, %v1696
        %v1698 = vrot.slane %v1690, %v1697
        %v1700 = vunpack.c.l.s4 1983009808
        %v1701 = vunpack.c.0.s8 %v1700
        %v1702 = vlaneseq
        %v1703 = vshrl.u32 %v1702, 7
        %v1704 = vsub.s32 %v1701, %v1703
        %v1705 = vrot.slane %v1691, %v1704
        %v1706 = vcombine.low %v1682, %v1698
        %v1707 = vcombine.high %v1682, %v1698
        %v1709 = vunpack.c.l.s4 1934713408
        %v1710 = vunpack.c.0.s8 %v1709
        %v1711 = vlaneseq
        %v1712 = vshrl.u32 %v1711, 7
        %v1713 = vsub.s32 %v1710, %v1712
        %v1714 = vrot.slane %v1706, %v1713
        %v1716 = vunpack.c.l.s4 1934713408
        %v1717 = vunpack.c.0.s8 %v1716
        %v1718 = vlaneseq
        %v1719 = vshrl.u32 %v1718, 7
        %v1720 = vsub.s32 %v1717, %v1719
        %v1721 = vrot.slane %v1707, %v1720
        %v1722 = vcombine.low %v1689, %v1705
        %v1723 = vcombine.high %v1714, 0.0
        %v1724 = vcombine.high %v1721, 0.0
        %v1726 = vunpack.c.l.s4 1934713408
        %v1727 = vunpack.c.0.s8 %v1726
        %v1728 = vlaneseq
        %v1729 = vshrl.u32 %v1728, 7
        %v1730 = vsub.s32 %v1727, %v1729
        %v1731 = vrot.slane %v1722, %v1730
        %v1732 = vlaneseq
        %v1733 = vshrl.u32 %v1732, 7
        %v1734 = vsub.s32 0, %v1733
        %v1735 = vrot.slane %v1244, %v1734
        %1737 = vbcast.lane.b32.xlu0 %v1735, 256
        %v1738 = vpop.permute.xlu0 %1737
        %v1739 = vlaneseq
        %v1740 = vshrl.u32 %v1739, 7
        %v1741 = vsub.s32 1, %v1740
        %v1742 = vrot.slane %v1244, %v1741
        %1744 = vbcast.lane.b32.xlu0 %v1742, 256
        %v1745 = vpop.permute.xlu0 %1744
        %v1746 = vlaneseq
        %v1747 = vshrl.u32 %v1746, 7
        %v1748 = vsub.s32 2, %v1747
        %v1749 = vrot.slane %v1244, %v1748
        %1751 = vbcast.lane.b32.xlu0 %v1749, 256
        %v1752 = vpop.permute.xlu0 %1751
        %v1753 = vlaneseq
        %v1754 = vshrl.u32 %v1753, 7
        %v1755 = vsub.s32 3, %v1754
        %v1756 = vrot.slane %v1244, %v1755
        %1758 = vbcast.lane.b32.xlu0 %v1756, 256
        %v1759 = vpop.permute.xlu0 %1758
        %v1760 = vlaneseq
        %v1761 = vshrl.u32 %v1760, 7
        %v1762 = vsub.s32 4, %v1761
        %v1763 = vrot.slane %v1244, %v1762
        %1765 = vbcast.lane.b32.xlu0 %v1763, 256
        %v1766 = vpop.permute.xlu0 %1765
        %v1767 = vmul.f32 %v1714, %v1738
        %v1768 = vmul.f32 %v1723, %v1745
        %v1769 = vmul.f32 %v1721, %v1752
        %v1770 = vmul.f32 %v1724, %v1759
        %v1771 = vcombine.low %v1767, %v1769
        %v1773 = vunpack.c.l.s4 1983009808
        %v1774 = vunpack.c.0.s8 %v1773
        %v1775 = vlaneseq
        %v1776 = vshrl.u32 %v1775, 7
        %v1777 = vsub.s32 %v1774, %v1776
        %v1778 = vrot.slane %v1771, %v1777
        %v1779 = vcombine.low %v1768, %v1770
        %v1781 = vunpack.c.l.s4 1983009808
        %v1782 = vunpack.c.0.s8 %v1781
        %v1783 = vlaneseq
        %v1784 = vshrl.u32 %v1783, 7
        %v1785 = vsub.s32 %v1782, %v1784
        %v1786 = vrot.slane %v1779, %v1785
        %v1787 = vmul.f32 %v1731, %v1766
        %v1789 = vunpack.c.l.s4 1983009808
        %v1790 = vunpack.c.0.s8 %v1789
        %v1791 = vlaneseq
        %v1792 = vshrl.u32 %v1791, 7
        %v1793 = vsub.s32 %v1790, %v1792
        %v1794 = vrot.slane %v1787, %v1793
        %v1795 = vcombine.low %v1778, %v1786
        %v1796 = vcombine.high %v1778, %v1786
        %v1798 = vunpack.c.l.s4 1934713408
        %v1799 = vunpack.c.0.s8 %v1798
        %v1800 = vlaneseq
        %v1801 = vshrl.u32 %v1800, 7
        %v1802 = vsub.s32 %v1799, %v1801
        %v1803 = vrot.slane %v1795, %v1802
        %v1805 = vunpack.c.l.s4 1934713408
        %v1806 = vunpack.c.0.s8 %v1805
        %v1807 = vlaneseq
        %v1808 = vshrl.u32 %v1807, 7
        %v1809 = vsub.s32 %v1806, %v1808
        %v1810 = vrot.slane %v1796, %v1809
        %v1811 = vcombine.high %v1794, 0.0
        %v1813 = vunpack.c.l.s4 1934713408
        %v1814 = vunpack.c.0.s8 %v1813
        %v1815 = vlaneseq
        %v1816 = vshrl.u32 %v1815, 7
        %v1817 = vsub.s32 %v1814, %v1816
        %v1818 = vrot.slane %v1794, %v1817
        %v1820 = vunpack.c.l.s4 1934713408
        %v1821 = vunpack.c.0.s8 %v1820
        %v1822 = vlaneseq
        %v1823 = vshrl.u32 %v1822, 7
        %v1824 = vsub.s32 %v1821, %v1823
        %v1825 = vrot.slane %v1811, %v1824
        %v1826 = vcombine.low %v1803, %v1818
        %v1827 = vcombine.high %v1803, %v1818
        %v1828 = vcombine.low %v1810, %v1825
        %v1829 = vcombine.high %v1810, %v1825
        %1831 = vrot.lane.b32.xlu0 %v1827, 32
        %v1832 = vpop.permute.xlu0 %1831
        %1835 = vrot.lane.b32.xlu0 %v1828, 64
        %v1836 = vpop.permute.xlu0 %1835
        %1839 = vrot.lane.b32.xlu0 %v1829, 96
        %v1840 = vpop.permute.xlu0 %1839
        %v1842 = vsel %vm973, %v1826, %v1832
        %vm1843 = vcmask 523264
        %v1844 = vsel %vm1843, %v1842, %v1836
        %vm1845 = vcmask 785408
        %v1846 = vsel %vm1845, %v1844, %v1840
        %v1847 = vpack.c.bf16 %v1846, %v1846
        %v1848 = vld [vmem:[%s400] sm:$0xf]
        %v1849 = vld [vmem:[%s400 + $0x4] sm:$0xf]
        %v1850 = vld [vmem:[%s400 + $0x8] sm:$0xf]
        %v1851 = vld [vmem:[%s400 + $0xc] sm:$0xf]
        %v1852 = vld [vmem:[%s400 + $0x10] sm:$0xf]
        %v1853 = vld [vmem:[%s400 + $0x14] sm:$0xf]
        %v1854 = vld [vmem:[%s400 + $0x18] sm:$0xf]
        %v1855 = vld [vmem:[%s400 + $0x1c] sm:$0xf]
        %v1856 = vld [vmem:[%s400 + $0x20] sm:$0xf]
        %v1857 = vld [vmem:[%s400 + $0x24] sm:$0xf]
        %v1858 = vld [vmem:[%s400 + $0x28] sm:$0xf]
        %v1859 = vld [vmem:[%s400 + $0x2c] sm:$0xf]
        %v1860 = vld [vmem:[%s400 + $0x30] sm:$0xf]
        %v1861 = vld [vmem:[%s400 + $0x34] sm:$0xf]
        %v1862 = vld [vmem:[%s400 + $0x38] sm:$0xf]
        %v1863 = vld [vmem:[%s400 + $0x3c] sm:$0xf]
        %v1864 = vlaneseq
        %v1865 = vshrl.u32 %v1864, 7
        %v1866 = vsub.s32 3, %v1865
        %v1867 = vrot.slane %v596, %v1866
        %v1884 = vunpack.c.l.b16 %v1848
        %v1885 = vunpack.c.l.b16 %v1849
        %v1886 = vunpack.c.l.b16 %v1850
        %v1887 = vunpack.c.l.b16 %v1851
        %v1888 = vunpack.c.l.b16 %v1852
        %v1889 = vunpack.c.l.b16 %v1853
        %v1890 = vunpack.c.l.b16 %v1854
        %v1891 = vunpack.c.l.b16 %v1855
        %v1892 = vunpack.c.l.b16 %v1856
        %v1893 = vunpack.c.l.b16 %v1857
        %v1894 = vunpack.c.l.b16 %v1858
        %v1895 = vunpack.c.l.b16 %v1859
        %v1896 = vunpack.c.l.b16 %v1860
        %v1897 = vunpack.c.l.b16 %v1861
        %v1898 = vunpack.c.l.b16 %v1862
        %v1899 = vunpack.c.l.b16 %v1863
        %v1900 = vpack.c.b16 %v1885, %v1884
        %v1901 = vpack.c.b16 %v1887, %v1886
        %v1902 = vpack.c.b16 %v1889, %v1888
        %v1903 = vpack.c.b16 %v1891, %v1890
        %v1904 = vpack.c.b16 %v1893, %v1892
        %v1905 = vpack.c.b16 %v1895, %v1894
        %v1906 = vpack.c.b16 %v1897, %v1896
        %v1907 = vpack.c.b16 %v1899, %v1898
        %1916 = vmatprep.subr.bf16.mxu0 0
        %1917 = vmatpush1.bf16.msra.mxu0 %v1900
        %1918 = vmatprep.subr.bf16.mxu0 0
        %1919 = vmatpush1.bf16.msra.mxu0 %v1901
        %1920 = vmatprep.subr.bf16.mxu0 0
        %1921 = vmatpush1.bf16.msra.mxu0 %v1902
        %1922 = vmatprep.subr.bf16.mxu0 0
        %1923 = vmatpush1.bf16.msra.mxu0 %v1903
        %1924 = vmatprep.subr.bf16.mxu0 0
        %1925 = vmatpush1.bf16.msra.mxu0 %v1904
        %1926 = vmatprep.subr.bf16.mxu0 0
        %1927 = vmatpush1.bf16.msra.mxu0 %v1905
        %1928 = vmatprep.subr.bf16.mxu0 0
        %1929 = vmatpush1.bf16.msra.mxu0 %v1906
        %1930 = vmatprep.subr.bf16.mxu0 0
        %1931 = vmatpush1.bf16.msra.mxu0 %v1907
        %1932 = vmatprep.subr.bf16.mxu0 0
        %1933 = vmatpush1.bf16.msra.mxu0 0
        %1934 = vmatprep.subr.bf16.mxu0 0
        %1935 = vmatpush1.bf16.msra.mxu0 0
        %1936 = vmatprep.subr.bf16.mxu0 0
        %1937 = vmatpush1.bf16.msra.mxu0 0
        %1938 = vmatprep.subr.bf16.mxu0 0
        %1939 = vmatpush1.bf16.msra.mxu0 0
        %1940 = vmatprep.subr.bf16.mxu0 0
        %1941 = vmatpush1.bf16.msra.mxu0 0
        %1942 = vmatprep.subr.bf16.mxu0 0
        %1943 = vmatpush1.bf16.msra.mxu0 0
        %1944 = vmatprep.subr.bf16.mxu0 0
        %1945 = vmatpush1.bf16.msra.mxu0 0
        %1946 = vmatprep.subr.bf16.mxu0 0
        %1947 = vmatpush1.bf16.msra.mxu0 0
        %1948 = vmatprep.mubr.bf16.mxu0 0
        %1949 = vmatmul.mubr.bf16.gmra.mrb[0].mxu0 %v1847
        %v1950 = vpop.f32.mrb[0].mxu0
        %v1951 = vadd.f32 %v1867, %v1950
        %v1952 = vpop.f32.mrb[0].mxu0
        %v1953 = vpop.f32.mrb[0].mxu0
        %v1954 = vpop.f32.mrb[0].mxu0
        %1955 = vdwg.mxu0
        %v1956 = vadd.f32 %v599, %v1951
        %v1957 = vsel %vm600, %v1956, 0.0
        %1958 = vadd.xlane.f32.xlu0 %v1957
        %v1959 = vpop.xlane.xlu0 %1958
        %v1960 = vmul.f32 %v1959, %v604
        %v1961 = vsub.f32 %v1956, %v1960
        %v1962 = vmul.f32 %v1961, %v1961
        %v1963 = vsel %vm600, %v1962, 0.0
        %1964 = vadd.xlane.f32.xlu0 %v1963
        %v1965 = vpop.xlane.xlu0 %1964
        %v1966 = vmul.f32 %v1965, %v604
        %v1967 = vadd.f32 %v1966, 1e-05
        %v1968 = vrsqrt.pop %v1967
        %v1969 = vmul.f32 %v1961, %v1968
        %v1970 = vlaneseq
        %v1971 = vshrl.u32 %v1970, 7
        %v1972 = vsub.s32 4, %v1971
        %v1973 = vrot.slane %v596, %v1972
        %v1974 = vmul.f32 %v1969, %v1973
        %v1975 = vlaneseq
        %v1976 = vshrl.u32 %v1975, 7
        %v1977 = vsub.s32 5, %v1976
        %v1978 = vrot.slane %v596, %v1977
        %v1979 = vadd.f32 %v1974, %v1978
        %v1980 = vpack.c.bf16 %v1979, %v1979
        %v1981 = vld [vmem:[%s405] sm:$0xff]
        %v1982 = vld [vmem:[%s405 + $0x8] sm:$0xff]
        %v1983 = vld [vmem:[%s405 + $0x10] sm:$0xff]
        %v1984 = vld [vmem:[%s405 + $0x18] sm:$0xff]
        %v1985 = vld [vmem:[%s405 + $0x20] sm:$0xff]
        %v1986 = vld [vmem:[%s405 + $0x28] sm:$0xff]
        %v1987 = vld [vmem:[%s405 + $0x30] sm:$0xff]
        %v1988 = vld [vmem:[%s405 + $0x38] sm:$0xff]
        %v1989 = vld [vmem:[%s405 + $0x40] sm:$0xff]
        %v1990 = vld [vmem:[%s405 + $0x48] sm:$0xff]
        %v1991 = vld [vmem:[%s405 + $0x50] sm:$0xff]
        %v1992 = vld [vmem:[%s405 + $0x58] sm:$0xff]
        %v1993 = vld [vmem:[%s405 + $0x60] sm:$0xff]
        %v1994 = vld [vmem:[%s405 + $0x68] sm:$0xff]
        %v1995 = vld [vmem:[%s405 + $0x70] sm:$0xff]
        %v1996 = vld [vmem:[%s405 + $0x78] sm:$0xff]
        %v1997 = vlaneseq
        %v1998 = vshrl.u32 %v1997, 7
        %v1999 = vsub.s32 6, %v1998
        %v2000 = vrot.slane %v596, %v1999
        %v2001 = vlaneseq
        %v2002 = vshrl.u32 %v2001, 7
        %v2003 = vsub.s32 6, %v2002
        %v2004 = vrot.slane %v597, %v2003
        %v2021 = vunpack.c.l.b16 %v1981
        %v2022 = vunpack.c.h.b16 %v1981
        %v2023 = vunpack.c.l.b16 %v1982
        %v2024 = vunpack.c.h.b16 %v1982
        %v2025 = vunpack.c.l.b16 %v1983
        %v2026 = vunpack.c.h.b16 %v1983
        %v2027 = vunpack.c.l.b16 %v1984
        %v2028 = vunpack.c.h.b16 %v1984
        %v2029 = vunpack.c.l.b16 %v1985
        %v2030 = vunpack.c.h.b16 %v1985
        %v2031 = vunpack.c.l.b16 %v1986
        %v2032 = vunpack.c.h.b16 %v1986
        %v2033 = vunpack.c.l.b16 %v1987
        %v2034 = vunpack.c.h.b16 %v1987
        %v2035 = vunpack.c.l.b16 %v1988
        %v2036 = vunpack.c.h.b16 %v1988
        %v2037 = vunpack.c.l.b16 %v1989
        %v2038 = vunpack.c.h.b16 %v1989
        %v2039 = vunpack.c.l.b16 %v1990
        %v2040 = vunpack.c.h.b16 %v1990
        %v2041 = vunpack.c.l.b16 %v1991
        %v2042 = vunpack.c.h.b16 %v1991
        %v2043 = vunpack.c.l.b16 %v1992
        %v2044 = vunpack.c.h.b16 %v1992
        %v2045 = vunpack.c.l.b16 %v1993
        %v2046 = vunpack.c.h.b16 %v1993
        %v2047 = vunpack.c.l.b16 %v1994
        %v2048 = vunpack.c.h.b16 %v1994
        %v2049 = vunpack.c.l.b16 %v1995
        %v2050 = vunpack.c.h.b16 %v1995
        %v2051 = vunpack.c.l.b16 %v1996
        %v2052 = vunpack.c.h.b16 %v1996
        %v2053 = vpack.c.b16 %v2023, %v2021
        %v2054 = vpack.c.b16 %v2024, %v2022
        %v2055 = vpack.c.b16 %v2027, %v2025
        %v2056 = vpack.c.b16 %v2028, %v2026
        %v2057 = vpack.c.b16 %v2031, %v2029
        %v2058 = vpack.c.b16 %v2032, %v2030
        %v2059 = vpack.c.b16 %v2035, %v2033
        %v2060 = vpack.c.b16 %v2036, %v2034
        %v2061 = vpack.c.b16 %v2039, %v2037
        %v2062 = vpack.c.b16 %v2040, %v2038
        %v2063 = vpack.c.b16 %v2043, %v2041
        %v2064 = vpack.c.b16 %v2044, %v2042
        %v2065 = vpack.c.b16 %v2047, %v2045
        %v2066 = vpack.c.b16 %v2048, %v2046
        %v2067 = vpack.c.b16 %v2051, %v2049
        %v2068 = vpack.c.b16 %v2052, %v2050
        %2085 = vmatprep.subr.bf16.mxu0 %v2054
        %2086 = vmatpush1.bf16.msra.mxu0 %v2053
        %2087 = vmatprep.subr.bf16.mxu0 %v2056
        %2088 = vmatpush1.bf16.msra.mxu0 %v2055
        %2089 = vmatprep.subr.bf16.mxu0 %v2058
        %2090 = vmatpush1.bf16.msra.mxu0 %v2057
        %2091 = vmatprep.subr.bf16.mxu0 %v2060
        %2092 = vmatpush1.bf16.msra.mxu0 %v2059
        %2093 = vmatprep.subr.bf16.mxu0 %v2062
        %2094 = vmatpush1.bf16.msra.mxu0 %v2061
        %2095 = vmatprep.subr.bf16.mxu0 %v2064
        %2096 = vmatpush1.bf16.msra.mxu0 %v2063
        %2097 = vmatprep.subr.bf16.mxu0 %v2066
        %2098 = vmatpush1.bf16.msra.mxu0 %v2065
        %2099 = vmatprep.subr.bf16.mxu0 %v2068
        %2100 = vmatpush1.bf16.msra.mxu0 %v2067
        %2101 = vmatprep.subr.bf16.mxu0 0
        %2102 = vmatpush1.bf16.msra.mxu0 0
        %2103 = vmatprep.subr.bf16.mxu0 0
        %2104 = vmatpush1.bf16.msra.mxu0 0
        %2105 = vmatprep.subr.bf16.mxu0 0
        %2106 = vmatpush1.bf16.msra.mxu0 0
        %2107 = vmatprep.subr.bf16.mxu0 0
        %2108 = vmatpush1.bf16.msra.mxu0 0
        %2109 = vmatprep.subr.bf16.mxu0 0
        %2110 = vmatpush1.bf16.msra.mxu0 0
        %2111 = vmatprep.subr.bf16.mxu0 0
        %2112 = vmatpush1.bf16.msra.mxu0 0
        %2113 = vmatprep.subr.bf16.mxu0 0
        %2114 = vmatpush1.bf16.msra.mxu0 0
        %2115 = vmatprep.subr.bf16.mxu0 0
        %2116 = vmatpush1.bf16.msra.mxu0 0
        %2117 = vmatprep.mubr.bf16.mxu0 0
        %2118 = vmatmul.mubr.bf16.gmra.mrb[0].mxu0 %v1980
        %v2119 = vpop.f32.mrb[0].mxu0
        %v2120 = vadd.f32 %v2000, %v2119
        %v2121 = vpop.f32.mrb[0].mxu0
        %v2122 = vadd.f32 %v2004, %v2121
        %v2123 = vpop.f32.mrb[0].mxu0
        %v2124 = vpop.f32.mrb[0].mxu0
        %2125 = vdwg.mxu0
        %v2126 = vmul.f32 %v2120, 1.702
        %v2127 = vmul.f32 %v2122, 1.702
        %v2128 = vxor.u32 %v2126, 2147483648
        %v2129 = vxor.u32 %v2127, 2147483648
        %v2130 = vmul.f32 %v2128, 1.442695
        %v2131 = vpow.pop %v2130
        %v2132 = vmul.f32 %v2129, 1.442695
        %v2133 = vpow.pop %v2132
        %v2134 = vadd.f32 %v2131, 1.0
        %v2135 = vadd.f32 %v2133, 1.0
        %v2136 = vrcp.pop %v2134
        %v2137 = vmul.f32 1.0, %v2136
        %v2138 = vrcp.pop %v2135
        %v2139 = vmul.f32 1.0, %v2138
        %v2140 = vmul.f32 %v2120, %v2137
        %v2141 = vmul.f32 %v2122, %v2139
        %v2142 = vpack.c.bf16 %v2140, %v2140
        %v2143 = vpack.c.bf16 %v2141, %v2141
        %v2144 = vld [vmem:[%s410] sm:$0xf]
        %v2145 = vld [vmem:[%s410 + $0x4] sm:$0xf]
        %v2146 = vld [vmem:[%s410 + $0x8] sm:$0xf]
        %v2147 = vld [vmem:[%s410 + $0xc] sm:$0xf]
        %v2148 = vld [vmem:[%s410 + $0x10] sm:$0xf]
        %v2149 = vld [vmem:[%s410 + $0x14] sm:$0xf]
        %v2150 = vld [vmem:[%s410 + $0x18] sm:$0xf]
        %v2151 = vld [vmem:[%s410 + $0x1c] sm:$0xf]
        %v2152 = vld [vmem:[%s410 + $0x20] sm:$0xf]
        %v2153 = vld [vmem:[%s410 + $0x24] sm:$0xf]
        %v2154 = vld [vmem:[%s410 + $0x28] sm:$0xf]
        %v2155 = vld [vmem:[%s410 + $0x2c] sm:$0xf]
        %v2156 = vld [vmem:[%s410 + $0x30] sm:$0xf]
        %v2157 = vld [vmem:[%s410 + $0x34] sm:$0xf]
        %v2158 = vld [vmem:[%s410 + $0x38] sm:$0xf]
        %v2159 = vld [vmem:[%s410 + $0x3c] sm:$0xf]
        %v2160 = vld [vmem:[%s410 + $0x40] sm:$0xf]
        %v2161 = vld [vmem:[%s410 + $0x44] sm:$0xf]
        %v2162 = vld [vmem:[%s410 + $0x48] sm:$0xf]
        %v2163 = vld [vmem:[%s410 + $0x4c] sm:$0xf]
        %v2164 = vld [vmem:[%s410 + $0x50] sm:$0xf]
        %v2165 = vld [vmem:[%s410 + $0x54] sm:$0xf]
        %v2166 = vld [vmem:[%s410 + $0x58] sm:$0xf]
        %v2167 = vld [vmem:[%s410 + $0x5c] sm:$0xf]
        %v2168 = vld [vmem:[%s410 + $0x60] sm:$0xf]
        %v2169 = vld [vmem:[%s410 + $0x64] sm:$0xf]
        %v2170 = vld [vmem:[%s410 + $0x68] sm:$0xf]
        %v2171 = vld [vmem:[%s410 + $0x6c] sm:$0xf]
        %v2172 = vld [vmem:[%s410 + $0x70] sm:$0xf]
        %v2173 = vld [vmem:[%s410 + $0x74] sm:$0xf]
        %v2174 = vld [vmem:[%s410 + $0x78] sm:$0xf]
        %v2175 = vld [vmem:[%s410 + $0x7c] sm:$0xf]
        %v2176 = vlaneseq
        %v2177 = vshrl.u32 %v2176, 7
        %v2178 = vsub.s32 7, %v2177
        %v2179 = vrot.slane %v596, %v2178
        %v2212 = vunpack.c.l.b16 %v2144
        %v2213 = vunpack.c.l.b16 %v2145
        %v2214 = vunpack.c.l.b16 %v2146
        %v2215 = vunpack.c.l.b16 %v2147
        %v2216 = vunpack.c.l.b16 %v2148
        %v2217 = vunpack.c.l.b16 %v2149
        %v2218 = vunpack.c.l.b16 %v2150
        %v2219 = vunpack.c.l.b16 %v2151
        %v2220 = vunpack.c.l.b16 %v2152
        %v2221 = vunpack.c.l.b16 %v2153
        %v2222 = vunpack.c.l.b16 %v2154
        %v2223 = vunpack.c.l.b16 %v2155
        %v2224 = vunpack.c.l.b16 %v2156
        %v2225 = vunpack.c.l.b16 %v2157
        %v2226 = vunpack.c.l.b16 %v2158
        %v2227 = vunpack.c.l.b16 %v2159
        %v2228 = vunpack.c.l.b16 %v2160
        %v2229 = vunpack.c.l.b16 %v2161
        %v2230 = vunpack.c.l.b16 %v2162
        %v2231 = vunpack.c.l.b16 %v2163
        %v2232 = vunpack.c.l.b16 %v2164
        %v2233 = vunpack.c.l.b16 %v2165
        %v2234 = vunpack.c.l.b16 %v2166
        %v2235 = vunpack.c.l.b16 %v2167
        %v2236 = vunpack.c.l.b16 %v2168
        %v2237 = vunpack.c.l.b16 %v2169
        %v2238 = vunpack.c.l.b16 %v2170
        %v2239 = vunpack.c.l.b16 %v2171
        %v2240 = vunpack.c.l.b16 %v2172
        %v2241 = vunpack.c.l.b16 %v2173
        %v2242 = vunpack.c.l.b16 %v2174
        %v2243 = vunpack.c.l.b16 %v2175
        %v2244 = vpack.c.b16 %v2213, %v2212
        %v2245 = vpack.c.b16 %v2215, %v2214
        %v2246 = vpack.c.b16 %v2217, %v2216
        %v2247 = vpack.c.b16 %v2219, %v2218
        %v2248 = vpack.c.b16 %v2221, %v2220
        %v2249 = vpack.c.b16 %v2223, %v2222
        %v2250 = vpack.c.b16 %v2225, %v2224
        %v2251 = vpack.c.b16 %v2227, %v2226
        %v2252 = vpack.c.b16 %v2229, %v2228
        %v2253 = vpack.c.b16 %v2231, %v2230
        %v2254 = vpack.c.b16 %v2233, %v2232
        %v2255 = vpack.c.b16 %v2235, %v2234
        %v2256 = vpack.c.b16 %v2237, %v2236
        %v2257 = vpack.c.b16 %v2239, %v2238
        %v2258 = vpack.c.b16 %v2241, %v2240
        %v2259 = vpack.c.b16 %v2243, %v2242
        %2276 = vmatprep.subr.bf16.mxu0 0
        %2277 = vmatpush1.bf16.msra.mxu0 %v2244
        %2278 = vmatprep.subr.bf16.mxu0 0
        %2279 = vmatpush1.bf16.msra.mxu0 %v2245
        %2280 = vmatprep.subr.bf16.mxu0 0
        %2281 = vmatpush1.bf16.msra.mxu0 %v2246
        %2282 = vmatprep.subr.bf16.mxu0 0
        %2283 = vmatpush1.bf16.msra.mxu0 %v2247
        %2284 = vmatprep.subr.bf16.mxu0 0
        %2285 = vmatpush1.bf16.msra.mxu0 %v2248
        %2286 = vmatprep.subr.bf16.mxu0 0
        %2287 = vmatpush1.bf16.msra.mxu0 %v2249
        %2288 = vmatprep.subr.bf16.mxu0 0
        %2289 = vmatpush1.bf16.msra.mxu0 %v2250
        %2290 = vmatprep.subr.bf16.mxu0 0
        %2291 = vmatpush1.bf16.msra.mxu0 %v2251
        %2292 = vmatprep.subr.bf16.mxu0 0
        %2293 = vmatpush1.bf16.msra.mxu0 %v2252
        %2294 = vmatprep.subr.bf16.mxu0 0
        %2295 = vmatpush1.bf16.msra.mxu0 %v2253
        %2296 = vmatprep.subr.bf16.mxu0 0
        %2297 = vmatpush1.bf16.msra.mxu0 %v2254
        %2298 = vmatprep.subr.bf16.mxu0 0
        %2299 = vmatpush1.bf16.msra.mxu0 %v2255
        %2300 = vmatprep.subr.bf16.mxu0 0
        %2301 = vmatpush1.bf16.msra.mxu0 %v2256
        %2302 = vmatprep.subr.bf16.mxu0 0
        %2303 = vmatpush1.bf16.msra.mxu0 %v2257
        %2304 = vmatprep.subr.bf16.mxu0 0
        %2305 = vmatpush1.bf16.msra.mxu0 %v2258
        %2306 = vmatprep.subr.bf16.mxu0 0
        %2307 = vmatpush1.bf16.msra.mxu0 %v2259
        %2308 = vmatprep.mubr.bf16.mxu0 %v2143
        %2309 = vmatmul.mubr.bf16.gmra.mrb[0].mxu0 %v2142
        %v2310 = vpop.f32.mrb[0].mxu0
        %v2311 = vadd.f32 %v2179, %v2310
        %v2312 = vpop.f32.mrb[0].mxu0
        %v2313 = vpop.f32.mrb[0].mxu0
        %v2314 = vpop.f32.mrb[0].mxu0
        %2315 = vdwg.mxu0
        %v2316 = vadd.f32 %v1956, %v2311
        %2317 = vst [vmem:[#allocation2] sm:$0x1f] %v2316
        // Predicated region
        $region57: #{language_bind_audio_tower_forward.1} parent=51 // pred_check
          %p2318 = pneg %p417
        $region58: #{language_bind_audio_tower_forward.1} parent=51 // pred_check_branch
          %2320 = sbr.rel (%p2318) target = $region60
        $region59: #{language_bind_audio_tower_forward.1} parent=51 // pred_region
          %2321 = vst [vmem:[%s385 - $0x1] sm:$0x1e] %v2316
        $region60: #{language_bind_audio_tower_forward.1} parent=51 // pred_fallthru
          _
        %s2322 = sand.u32 %s240, 1
        %s2323 = scalar_lea.sflag [#allocation4], %s2322
        %s2324 = sand.u32 %s240, 1
        %s2325 = smul.addr %s2324, 4
        %s2326 = scalar_lea.vmem [#allocation3], %s2325
        // Predicated region
        $region61: #{language_bind_audio_tower_forward.1} parent=51 // pred_check
          %p2327 = pneg %p250
        $region62: #{language_bind_audio_tower_forward.1} parent=51 // pred_check_branch
          %2329 = sbr.rel (%p2327) target = $region64
        $region63: #{language_bind_audio_tower_forward.1} parent=51 // pred_region
          %s2331 = ssub.s32 64, 64
          %2332 = vsyncadd %s2323, %s2331
          %s2333 = smul.addr %s26, 64
          %s2334 = scalar_lea.hbm %s8, %s2333
          %s2336 = sshll.u32 %s2326, 4
          %s2337 = int_to_ptr.vmem [resolvable:$true] %s2336
          %2339 = dma.vmem_to_hbm [thread:$0]  %s2337, 64, %s2334, %s2323
        $region64: #{language_bind_audio_tower_forward.1} parent=51 // pred_fallthru
          _
      $region52: #{language_bind_audio_tower_forward.1} parent=5 // pred_fallthru
        _
      %p2340 = scmp.le.s32.totalorder 2, %s17
      // Predicated region
      $region65: #{language_bind_audio_tower_forward.1} parent=5 // pred_check
        %p2341 = pneg %p2340
      $region66: #{language_bind_audio_tower_forward.1} parent=5 // pred_check_branch
        %2343 = sbr.rel (%p2341) target = $region68
      $region67: #{language_bind_audio_tower_forward.1} parent=5 // pred_region
        %s2344 = ssub.s32 %s17, 2
        // Predicated region
        $region69: #{language_bind_audio_tower_forward.1} parent=67 // pred_check
          %p2345 = pneg %p256
        $region70: #{language_bind_audio_tower_forward.1} parent=67 // pred_check_branch
          %2347 = sbr.rel (%p2345) target = $region72
        $region71: #{language_bind_audio_tower_forward.1} parent=67 // pred_region
          %s2348 = sand.u32 %s241, 1
          %s2349 = scalar_lea.sflag [#allocation4], %s2348
          %s2350 = sand.u32 %s241, 1
          %s2351 = smul.addr %s2350, 4
          %s2352 = scalar_lea.vmem [#allocation3], %s2351
          %2353 = dma.done %s2349, 64
        $region72: #{language_bind_audio_tower_forward.1} parent=67 // pred_fallthru
          _
      $region68: #{language_bind_audio_tower_forward.1} parent=5 // pred_fallthru
        _
    $region6: #{language_bind_audio_tower_forward.1} parent=1 // loop_footer
      %s21 = sadd.s32 1, %s17
    $region7: #{language_bind_audio_tower_forward.1} parent=1 // loop_footer_branch
      %16 = sbr.rel target = $region3
    $region8: #{language_bind_audio_tower_forward.1} parent=1 // loop_exit
      _
    %2354 = vsyncpa [#allocation4], 1
    %s2355 = scalar_lea.sflag [#allocation4], 1
    %2356 = vsyncpa %s2355, 1

</llo_original>
